<compile_context>
chip_gen: v5e
topology: v5e:2x2
jax: 0.10.0
libtpu: 0.0.40
codegen_flags: <defaults>
</compile_context>

<pallas_src>
import math
import jax
import jax.numpy as jnp
from jax import lax
from jax.experimental import pallas as pl
from jax.experimental.pallas import tpu as pltpu


_SQRT_HALF = 1.0 / math.sqrt(2.0)


def _round_up(x: int, m: int) -> int:
    return ((x + m - 1) // m) * m


def _mlp_kernel(x_ref, w1_ref, b1_ref, gamma_ref, beta_ref, w2_ref, b2_ref, o_ref):
    # ---- L2 normalize along last dim (== F.normalize, eps=1e-12 on the norm) ----
    # rsqrt on sum-of-squares: 1/sqrt(max(ss,1e-24)) == 1/max(sqrt(ss),1e-12)
    x = x_ref[...].astype(jnp.float32)
    ss = jnp.sum(x * x, axis=-1, keepdims=True)
    x = x * lax.rsqrt(jnp.maximum(ss, jnp.float32(1e-24)))

    # ---- Linear1: (TB, E) @ (E, H) + b1 ; matmul in the weight dtype, f32 acc ----
    w1 = w1_ref[...]
    h = jnp.dot(x.astype(w1.dtype), w1, preferred_element_type=jnp.float32)
    h = h + b1_ref[...].astype(jnp.float32)

    # ---- LayerNorm over hidden dim (eps=1e-5, elementwise affine) ----
    mu = jnp.mean(h, axis=-1, keepdims=True)
    d = h - mu
    var = jnp.mean(d * d, axis=-1, keepdims=True)
    h = d * lax.rsqrt(var + jnp.float32(1e-5))
    h = h * gamma_ref[...].astype(jnp.float32) + beta_ref[...].astype(jnp.float32)

    # ---- GELU (exact erf form; bit-parity with nn.GELU() default) ----
    h = 0.5 * h * (1.0 + lax.erf(h * jnp.float32(_SQRT_HALF)))

    # ---- Linear2: (TB, H) @ (H, O) + b2 ----
    w2 = w2_ref[...]
    y = jnp.dot(h.astype(w2.dtype), w2, preferred_element_type=jnp.float32)
    y = y + b2_ref[...].astype(jnp.float32)

    o_ref[...] = y.astype(o_ref.dtype)


def _pick_block_b(B, E, H, O, in_dtype, w_dtype, *, vmem_budget=24 << 20, cap=1024):
    """Largest batch tile (multiple of the sublane packing) under a VMEM budget."""
    sub = 16 if jnp.dtype(in_dtype) == jnp.bfloat16 else 8
    in_bytes = jnp.dtype(in_dtype).itemsize
    w_bytes = jnp.dtype(w_dtype).itemsize
    # Resident weights/biases (counted x2: pipeline buffer allocation is conservative).
    weight_bytes = 2 * (E * H + 3 * H + H * O + O) * w_bytes
    # Per batch-row cost: double-buffered in/out tiles + f32 temporaries (x, h, y).
    per_row = 2 * (E + O) * in_bytes + 2 * (E + H + O) * 4
    avail = max(vmem_budget - weight_bytes, per_row * sub)
    tb = max(sub, (avail // per_row) // sub * sub)
    tb = min(tb, cap, _round_up(B, sub))
    return max(sub, _round_up(tb, sub) if tb % sub else tb)


def embedding_vector_mlp(embed, w1, b1, gamma, beta, w2, b2,
                         output_seq_len, output_dim, *, block_b=None):
    """embed: (B, E) -> (B, output_seq_len, output_dim)."""
    B, E = embed.shape
    H = w1.shape[1]
    O = w2.shape[1]
    assert O == output_seq_len * output_dim

    sub = 16 if embed.dtype == jnp.bfloat16 else 8
    if block_b is None:
        block_b = _pick_block_b(B, E, H, O, embed.dtype, w1.dtype)
    block_b = max(sub, _round_up(block_b, sub))

    n_tiles = pl.cdiv(B, block_b)
    B_pad = n_tiles * block_b
    if B_pad != B:
        # Zero rows L2-normalize to zero (rsqrt path keeps them finite), so padding is safe.
        embed = jnp.pad(embed, ((0, B_pad - B), (0, 0)))

    itm = lambda a: a.size * a.dtype.itemsize
    cost = pl.CostEstimate(
        flops=2 * B_pad * (E * H + H * O),
        transcendentals=B_pad * (2 + 2 * H),          # rsqrt (L2, LN) + erf per hidden elem
        bytes_accessed=(B_pad * E * embed.dtype.itemsize
                        + itm(w1) + itm(b1) + itm(gamma) + itm(beta) + itm(w2) + itm(b2)
                        + B_pad * O * embed.dtype.itemsize),
    )

    out = pl.pallas_call(
        _mlp_kernel,
        out_shape=jax.ShapeDtypeStruct((B_pad, O), embed.dtype),
        grid_spec=pltpu.PrefetchScalarGridSpec(
            num_scalar_prefetch=0,
            grid=(n_tiles,),
            in_specs=[
                pl.BlockSpec((block_b, E), lambda i: (i, 0)),   # embed tile (pipelined)
                pl.BlockSpec((E, H), lambda i: (0, 0)),         # W1 (in, out) — resident
                pl.BlockSpec((1, H), lambda i: (0, 0)),         # b1
                pl.BlockSpec((1, H), lambda i: (0, 0)),         # LayerNorm gamma
                pl.BlockSpec((1, H), lambda i: (0, 0)),         # LayerNorm beta
                pl.BlockSpec((H, O), lambda i: (0, 0)),         # W2 (in, out) — resident
                pl.BlockSpec((1, O), lambda i: (0, 0)),         # b2
            ],
            out_specs=pl.BlockSpec((block_b, O), lambda i: (i, 0)),   # lane-dense O
        ),
        compiler_params=pltpu.CompilerParams(
            dimension_semantics=("parallel",)),                 # megacore on v7x
        cost_estimate=cost,
    )(embed, w1, b1, gamma, beta, w2, b2)

    if B_pad != B:
        out = out[:B]
    return out.reshape(B, output_seq_len, output_dim)


def _reference(embed, w1, b1, gamma, beta, w2, b2, output_seq_len, output_dim):
    x = embed.astype(jnp.float32)
    x = x / jnp.maximum(jnp.linalg.norm(x, axis=-1, keepdims=True), 1e-12)
    h = x @ w1.astype(jnp.float32) + b1[0].astype(jnp.float32)
    mu = jnp.mean(h, axis=-1, keepdims=True)
    var = jnp.mean((h - mu) ** 2, axis=-1, keepdims=True)
    h = (h - mu) / jnp.sqrt(var + 1e-5) * gamma[0].astype(jnp.float32) + beta[0].astype(jnp.float32)
    h = 0.5 * h * (1.0 + lax.erf(h / jnp.sqrt(2.0)))
    y = h @ w2.astype(jnp.float32) + b2[0].astype(jnp.float32)
    return y.reshape(embed.shape[0], output_seq_len, output_dim).astype(embed.dtype)


if __name__ == "__main__":
    # Module hyperparameters (small, consistent with __init__ logic):
    embed_dim = 32
    output_dim = 16
    output_seq_len = 8
    output_size = output_seq_len * output_dim                        # 128 (lane-dense)
    # hidden_layer='amean': round(((32+128)//2) / 64) * 64 = 64
    hidden_size = round(((embed_dim + output_size) // 2) / 64) * 64  # 64
    batch = 500                                                      # exercises padding

    key = jax.random.PRNGKey(0)
    k_x, k_w1, k_w2 = jax.random.split(key, 3)

    # Deterministic synthetic parameter init (shapes match the nn.Module):
    # hidden_std mirrors init_unit_norm=True path: sqrt(output_seq_len / hidden_size)
    hidden_std = math.sqrt(output_seq_len / hidden_size)
    w1 = jax.random.normal(k_w1, (embed_dim, hidden_size), jnp.float32) * hidden_std
    b1 = jnp.zeros((1, hidden_size), jnp.float32)                 # init_bias_zero
    gamma = jnp.full((1, hidden_size), hidden_std, jnp.float32)   # LayerNorm weight = hidden_std
    beta = jnp.zeros((1, hidden_size), jnp.float32)               # LayerNorm bias = 0
    w2 = jax.random.normal(k_w2, (hidden_size, output_size), jnp.float32) * (
        1.0 / math.sqrt(output_size))
    b2 = jnp.zeros((1, output_size), jnp.float32)                 # init_output_bias_zero

    embed = jax.random.normal(k_x, (batch, embed_dim), jnp.float32)

    # Explicit small tile -> multi-step grid + padding path exercised; default
    # (block_b=None) picks the largest VMEM-fitting tile for production shapes.
    out = embedding_vector_mlp(embed, w1, b1, gamma, beta, w2, b2,
                               output_seq_len, output_dim, block_b=128)
    out = jax.block_until_ready(out)

    ref = _reference(embed, w1, b1, gamma, beta, w2, b2, output_seq_len, output_dim)
    assert out.shape == (batch, output_seq_len, output_dim)
    assert jnp.allclose(out, ref, atol=1e-4, rtol=1e-4), "mismatch vs reference"

    # Also check the default (auto) tile selection path once.
    out2 = jax.block_until_ready(
        embedding_vector_mlp(embed, w1, b1, gamma, beta, w2, b2,
                             output_seq_len, output_dim))
    assert jnp.allclose(out2, ref, atol=1e-4, rtol=1e-4), "mismatch vs reference (auto tile)"

    print("KERNEL_OK")
</pallas_src>

<mosaic_0001>
module attributes {stable_mosaic.version = 11 : i64} {
  func.func @_mlp_kernel(%arg0: i32, %arg1: memref<128x32xf32, #tpu.memory_space<vmem>>, %arg2: memref<32x64xf32, #tpu.memory_space<vmem>>, %arg3: memref<1x64xf32, #tpu.memory_space<vmem>>, %arg4: memref<1x64xf32, #tpu.memory_space<vmem>>, %arg5: memref<1x64xf32, #tpu.memory_space<vmem>>, %arg6: memref<64x128xf32, #tpu.memory_space<vmem>>, %arg7: memref<1x128xf32, #tpu.memory_space<vmem>>, %arg8: memref<128x128xf32, #tpu.memory_space<vmem>>) attributes {dimension_semantics = [#tpu.dimension_semantics<parallel>], iteration_bounds = array<i64: 4>, scalar_prefetch = 0 : i64, scratch_operands = 0 : i64, tpu.core_type = #tpu.core_type<tc>, window_params = [{transform_indices = @transform_0, window_bounds = array<i64: 128, 32>}, {pipeline_mode = #tpu.pipeline_mode<synchronous>, transform_indices = @transform_1, window_bounds = array<i64: 32, 64>}, {pipeline_mode = #tpu.pipeline_mode<synchronous>, transform_indices = @transform_2, window_bounds = array<i64: 1, 64>}, {pipeline_mode = #tpu.pipeline_mode<synchronous>, transform_indices = @transform_3, window_bounds = array<i64: 1, 64>}, {pipeline_mode = #tpu.pipeline_mode<synchronous>, transform_indices = @transform_4, window_bounds = array<i64: 1, 64>}, {pipeline_mode = #tpu.pipeline_mode<synchronous>, transform_indices = @transform_5, window_bounds = array<i64: 64, 128>}, {pipeline_mode = #tpu.pipeline_mode<synchronous>, transform_indices = @transform_6, window_bounds = array<i64: 1, 128>}, {transform_indices = @transform_7, window_bounds = array<i64: 128, 128>}]} {
    %c0 = arith.constant 0 : index
    %c0_0 = arith.constant 0 : index
    %0 = vector.load %arg1[%c0, %c0_0] : memref<128x32xf32, #tpu.memory_space<vmem>>, vector<128x32xf32>
    %1 = arith.mulf %0, %0 : vector<128x32xf32>
    %cst = arith.constant dense<0.000000e+00> : vector<128xf32>
    %2 = vector.multi_reduction <add>, %1, %cst [1] : vector<128x32xf32> to vector<128xf32>
    %3 = vector.shape_cast %2 : vector<128xf32> to vector<128x1xf32>
    %cst_1 = arith.constant 1.000000e-24 : f32
    %4 = vector.broadcast %cst_1 : f32 to vector<128x1xf32>
    %5 = arith.maximumf %3, %4 : vector<128x1xf32>
    %6 = math.rsqrt %5 : vector<128x1xf32>
    %7 = vector.broadcast %6 : vector<128x1xf32> to vector<128x32xf32>
    %8 = arith.mulf %0, %7 : vector<128x32xf32>
    %c0_2 = arith.constant 0 : index
    %c0_3 = arith.constant 0 : index
    %9 = vector.load %arg2[%c0_2, %c0_3] : memref<32x64xf32, #tpu.memory_space<vmem>>, vector<32x64xf32>
    %cst_4 = arith.constant dense<0.000000e+00> : vector<128x64xf32>
    %10 = tpu.matmul %8, %9, %cst_4 {dimension_numbers = #tpu.dot_dimension_numbers<[1], [0], [0], [1], [0, 0, 1, 1], [], []>} : vector<128x32xf32>, vector<32x64xf32>, vector<128x64xf32> -> vector<128x64xf32>
    %c0_5 = arith.constant 0 : index
    %c0_6 = arith.constant 0 : index
    %11 = vector.load %arg3[%c0_5, %c0_6] : memref<1x64xf32, #tpu.memory_space<vmem>>, vector<1x64xf32>
    %12 = vector.broadcast %11 : vector<1x64xf32> to vector<128x64xf32>
    %13 = arith.addf %10, %12 : vector<128x64xf32>
    %cst_7 = arith.constant dense<0.000000e+00> : vector<128xf32>
    %14 = vector.multi_reduction <add>, %13, %cst_7 [1] : vector<128x64xf32> to vector<128xf32>
    %15 = vector.shape_cast %14 : vector<128xf32> to vector<128x1xf32>
    %cst_8 = arith.constant 6.400000e+01 : f32
    %16 = vector.broadcast %cst_8 : f32 to vector<128x1xf32>
    %17 = arith.divf %15, %16 : vector<128x1xf32>
    %18 = vector.broadcast %17 : vector<128x1xf32> to vector<128x64xf32>
    %19 = arith.subf %13, %18 : vector<128x64xf32>
    %20 = arith.mulf %19, %19 : vector<128x64xf32>
    %cst_9 = arith.constant dense<0.000000e+00> : vector<128xf32>
    %21 = vector.multi_reduction <add>, %20, %cst_9 [1] : vector<128x64xf32> to vector<128xf32>
    %22 = vector.shape_cast %21 : vector<128xf32> to vector<128x1xf32>
    %cst_10 = arith.constant 6.400000e+01 : f32
    %23 = vector.broadcast %cst_10 : f32 to vector<128x1xf32>
    %24 = arith.divf %22, %23 : vector<128x1xf32>
    %cst_11 = arith.constant 9.99999974E-6 : f32
    %25 = vector.broadcast %cst_11 : f32 to vector<128x1xf32>
    %26 = arith.addf %24, %25 : vector<128x1xf32>
    %27 = math.rsqrt %26 : vector<128x1xf32>
    %28 = vector.broadcast %27 : vector<128x1xf32> to vector<128x64xf32>
    %29 = arith.mulf %19, %28 : vector<128x64xf32>
    %c0_12 = arith.constant 0 : index
    %c0_13 = arith.constant 0 : index
    %30 = vector.load %arg4[%c0_12, %c0_13] : memref<1x64xf32, #tpu.memory_space<vmem>>, vector<1x64xf32>
    %31 = vector.broadcast %30 : vector<1x64xf32> to vector<128x64xf32>
    %32 = arith.mulf %29, %31 : vector<128x64xf32>
    %c0_14 = arith.constant 0 : index
    %c0_15 = arith.constant 0 : index
    %33 = vector.load %arg5[%c0_14, %c0_15] : memref<1x64xf32, #tpu.memory_space<vmem>>, vector<1x64xf32>
    %34 = vector.broadcast %33 : vector<1x64xf32> to vector<128x64xf32>
    %35 = arith.addf %32, %34 : vector<128x64xf32>
    %cst_16 = arith.constant 5.000000e-01 : f32
    %36 = vector.broadcast %cst_16 : f32 to vector<128x64xf32>
    %37 = arith.mulf %36, %35 : vector<128x64xf32>
    %cst_17 = arith.constant 0.707106769 : f32
    %38 = vector.broadcast %cst_17 : f32 to vector<128x64xf32>
    %39 = arith.mulf %35, %38 : vector<128x64xf32>
    %40 = math.erf %39 : vector<128x64xf32>
    %cst_18 = arith.constant 1.000000e+00 : f32
    %41 = vector.broadcast %cst_18 : f32 to vector<128x64xf32>
    %42 = arith.addf %41, %40 : vector<128x64xf32>
    %43 = arith.mulf %37, %42 : vector<128x64xf32>
    %c0_19 = arith.constant 0 : index
    %c0_20 = arith.constant 0 : index
    %44 = vector.load %arg6[%c0_19, %c0_20] : memref<64x128xf32, #tpu.memory_space<vmem>>, vector<64x128xf32>
    %cst_21 = arith.constant dense<0.000000e+00> : vector<128x128xf32>
    %45 = tpu.matmul %43, %44, %cst_21 {dimension_numbers = #tpu.dot_dimension_numbers<[1], [0], [0], [1], [0, 0, 1, 1], [], []>} : vector<128x64xf32>, vector<64x128xf32>, vector<128x128xf32> -> vector<128x128xf32>
    %c0_22 = arith.constant 0 : index
    %c0_23 = arith.constant 0 : index
    %46 = vector.load %arg7[%c0_22, %c0_23] : memref<1x128xf32, #tpu.memory_space<vmem>>, vector<1x128xf32>
    %47 = vector.broadcast %46 : vector<1x128xf32> to vector<128x128xf32>
    %48 = arith.addf %45, %47 : vector<128x128xf32>
    %c0_24 = arith.constant 0 : index
    %c0_25 = arith.constant 0 : index
    %49 = vector.load %arg8[%c0_24, %c0_25] : memref<128x128xf32, #tpu.memory_space<vmem>>, vector<128x128xf32>
    tpu.vector_store %arg8[%c0_24, %c0_25], %48 {strides = array<i32>} : memref<128x128xf32, #tpu.memory_space<vmem>>, vector<128x128xf32>,
    return
  }
  func.func @transform_0(%arg0: i32) -> (i32, i32) {
    %c0_i32 = arith.constant 0 : i32
    %c0_i32_0 = arith.constant 0 : i32
    return %arg0, %c0_i32 : i32, i32
  }
  func.func @transform_1(%arg0: i32) -> (i32, i32) {
    %c0_i32 = arith.constant 0 : i32
    %c0_i32_0 = arith.constant 0 : i32
    %c0_i32_1 = arith.constant 0 : i32
    return %c0_i32, %c0_i32_0 : i32, i32
  }
  func.func @transform_2(%arg0: i32) -> (i32, i32) {
    %c0_i32 = arith.constant 0 : i32
    %c0_i32_0 = arith.constant 0 : i32
    %c0_i32_1 = arith.constant 0 : i32
    return %c0_i32, %c0_i32_0 : i32, i32
  }
  func.func @transform_3(%arg0: i32) -> (i32, i32) {
    %c0_i32 = arith.constant 0 : i32
    %c0_i32_0 = arith.constant 0 : i32
    %c0_i32_1 = arith.constant 0 : i32
    return %c0_i32, %c0_i32_0 : i32, i32
  }
  func.func @transform_4(%arg0: i32) -> (i32, i32) {
    %c0_i32 = arith.constant 0 : i32
    %c0_i32_0 = arith.constant 0 : i32
    %c0_i32_1 = arith.constant 0 : i32
    return %c0_i32, %c0_i32_0 : i32, i32
  }
  func.func @transform_5(%arg0: i32) -> (i32, i32) {
    %c0_i32 = arith.constant 0 : i32
    %c0_i32_0 = arith.constant 0 : i32
    %c0_i32_1 = arith.constant 0 : i32
    return %c0_i32, %c0_i32_0 : i32, i32
  }
  func.func @transform_6(%arg0: i32) -> (i32, i32) {
    %c0_i32 = arith.constant 0 : i32
    %c0_i32_0 = arith.constant 0 : i32
    %c0_i32_1 = arith.constant 0 : i32
    return %c0_i32, %c0_i32_0 : i32, i32
  }
  func.func @transform_7(%arg0: i32) -> (i32, i32) {
    %c0_i32 = arith.constant 0 : i32
    %c0_i32_0 = arith.constant 0 : i32
    return %arg0, %c0_i32 : i32, i32
  }
}

</mosaic_0001>

<llo_original>
// kernel: tpu_custom_call.1
$region0: #{tpu_custom_call.1}
  #allocation0 [shape = 'u32[]', space=smem, size = 0x4, offset = 0x4, fixed_abs, tag = 'smem constant byte address 0x4 - core index']
  #allocation1 [shape = 'u32[72,128]{1,0:T(1,128)}', space=vmem, size = 0x9000, scoped, tag = 'internal scratch']
  %s0 = inlined_call_operand.vmem [shape: f32[512,32], index: 0, kind: input, shape index: {}]
  %s1 = inlined_call_operand.vmem [shape: f32[32,64], index: 1, kind: input, shape index: {}]
  %s2 = inlined_call_operand.vmem [shape: f32[1,64], index: 2, kind: input, shape index: {}]
  %s3 = inlined_call_operand.vmem [shape: f32[1,64], index: 3, kind: input, shape index: {}]
  %s4 = inlined_call_operand.vmem [shape: f32[1,64], index: 4, kind: input, shape index: {}]
  %s5 = inlined_call_operand.vmem [shape: f32[64,128], index: 5, kind: input, shape index: {}]
  %s6 = inlined_call_operand.vmem [shape: f32[1,128], index: 6, kind: input, shape index: {}]
  %s7 = inlined_call_operand.hbm [shape: f32[512,128], index: 7, kind: output, shape index: {}]
  %s8 = sld [smem:[#allocation0]]
  $region61: #{tpu_custom_call.1} parent=0
    _
  %s10 = ssub.s32 1, %s8
  %s11 = scalar_select 0, %s10, %s8
  $region1: #{tpu_custom_call.1} parent=0
    #allocation2 [shape = 'u8[131072]{0}', space=vmem, size = 0x20000, scoped, tag = 'output window, operand 0']
    #allocation3 [shape = 's32[2]{0}', space=sflag, size = 0x8, scoped, tag = 'scoped memory for tpu_custom_call.1']
    %12 = vsyncpa [#allocation3], 0
    %s13 = scalar_lea.sflag [#allocation3], 1
    %14 = vsyncpa %s13, 0
    loop: start=0, step=1, limit=6
    $region2: #{tpu_custom_call.1} parent=1 // loop_pre_header
      _
    $region3: #{tpu_custom_call.1} parent=1 // loop_header
      %s16 = sphi 0, %s20
      %p17 = scmp.ge.s32.totalorder %s16, 6
      %s26 = sphi 0, %s28
      %s29 = sphi 0, %s26
      %s30 = sphi 0, %s29
      %s46 = sphi 0, %s30
      %s50 = sphi 0, %s50
      %s52 = sphi 0, %s50
      %s53 = sphi 0, %s52
      %s67 = sphi 0, %s53
      %s71 = sphi 0, %s71
      %s73 = sphi 0, %s71
      %s74 = sphi 0, %s73
      %s88 = sphi 0, %s74
      %s92 = sphi 0, %s92
      %s94 = sphi 0, %s92
      %s95 = sphi 0, %s94
      %s109 = sphi 0, %s95
      %s113 = sphi 0, %s113
      %s115 = sphi 0, %s113
      %s116 = sphi 0, %s115
      %s130 = sphi 0, %s116
      %s134 = sphi 0, %s134
      %s136 = sphi 0, %s134
      %s137 = sphi 0, %s136
      %s151 = sphi 0, %s137
      %s155 = sphi 0, %s155
      %s157 = sphi 0, %s155
      %s158 = sphi 0, %s157
      %s172 = sphi 0, %s158
      %s178 = sphi 0, %s180
      %s181 = sphi 0, %s178
      %s182 = sphi 0, %s181
      %s198 = sphi 0, %s182
    $region4: #{tpu_custom_call.1} parent=1 // loop_header_branch
      %19 = sbr.rel (%p17) target = $region8
    $region5: #{tpu_custom_call.1} parent=1 // loop_body
      %s21 = ssub.s32 %s16, 1
      %s22 = ssub.s32 %s16, 2
      %s23 = sadd.s32 %s16, 1
      %s24 = ssub.s32 %s16, %s23
      %p25 = scmp.eq.s32.totalorder %s24, 0
      %s27 = sadd.s32 %s26, 1
      %s28 = scalar_select %p25, %s26, %s27
      %p31 = pneg %p25
      %p32 = scmp.eq.s32.totalorder %s16, 3
      %p33 = por %p31, %p32
      %p34 = scmp.ne.s32.totalorder %s26, %s29
      %p35 = scmp.eq.s32.totalorder %s16, 0
      %p36 = por %p34, %p35
      %p37 = scmp.ne.s32.totalorder %s26, %s29
      %p38 = scmp.eq.s32.totalorder %s21, 3
      %p39 = por %p37, %p38
      %p40 = scmp.ne.s32.totalorder %s29, %s30
      %p41 = scmp.eq.s32.totalorder %s21, 0
      %p42 = por %p40, %p41
      %p43 = scmp.ne.s32.totalorder %s29, %s30
      %p44 = scmp.eq.s32.totalorder %s22, 3
      %p45 = por %p43, %p44
      %p47 = scmp.ne.s32.totalorder %s30, %s46
      %p48 = scmp.eq.s32.totalorder %s22, 0
      %p49 = por %p47, %p48
      %s51 = sadd.s32 %s50, 1
      %p54 = scmp.eq.s32.totalorder %s16, 3
      %p55 = scmp.ne.s32.totalorder %s50, %s52
      %p56 = scmp.eq.s32.totalorder %s16, 0
      %p57 = por %p55, %p56
      %p58 = scmp.ne.s32.totalorder %s50, %s52
      %p59 = scmp.eq.s32.totalorder %s21, 3
      %p60 = por %p58, %p59
      %p61 = scmp.ne.s32.totalorder %s52, %s53
      %p62 = scmp.eq.s32.totalorder %s21, 0
      %p63 = por %p61, %p62
      %p64 = scmp.ne.s32.totalorder %s52, %s53
      %p65 = scmp.eq.s32.totalorder %s22, 3
      %p66 = por %p64, %p65
      %p68 = scmp.ne.s32.totalorder %s53, %s67
      %p69 = scmp.eq.s32.totalorder %s22, 0
      %p70 = por %p68, %p69
      %s72 = sadd.s32 %s71, 1
      %p75 = scmp.eq.s32.totalorder %s16, 3
      %p76 = scmp.ne.s32.totalorder %s71, %s73
      %p77 = scmp.eq.s32.totalorder %s16, 0
      %p78 = por %p76, %p77
      %p79 = scmp.ne.s32.totalorder %s71, %s73
      %p80 = scmp.eq.s32.totalorder %s21, 3
      %p81 = por %p79, %p80
      %p82 = scmp.ne.s32.totalorder %s73, %s74
      %p83 = scmp.eq.s32.totalorder %s21, 0
      %p84 = por %p82, %p83
      %p85 = scmp.ne.s32.totalorder %s73, %s74
      %p86 = scmp.eq.s32.totalorder %s22, 3
      %p87 = por %p85, %p86
      %p89 = scmp.ne.s32.totalorder %s74, %s88
      %p90 = scmp.eq.s32.totalorder %s22, 0
      %p91 = por %p89, %p90
      %s93 = sadd.s32 %s92, 1
      %p96 = scmp.eq.s32.totalorder %s16, 3
      %p97 = scmp.ne.s32.totalorder %s92, %s94
      %p98 = scmp.eq.s32.totalorder %s16, 0
      %p99 = por %p97, %p98
      %p100 = scmp.ne.s32.totalorder %s92, %s94
      %p101 = scmp.eq.s32.totalorder %s21, 3
      %p102 = por %p100, %p101
      %p103 = scmp.ne.s32.totalorder %s94, %s95
      %p104 = scmp.eq.s32.totalorder %s21, 0
      %p105 = por %p103, %p104
      %p106 = scmp.ne.s32.totalorder %s94, %s95
      %p107 = scmp.eq.s32.totalorder %s22, 3
      %p108 = por %p106, %p107
      %p110 = scmp.ne.s32.totalorder %s95, %s109
      %p111 = scmp.eq.s32.totalorder %s22, 0
      %p112 = por %p110, %p111
      %s114 = sadd.s32 %s113, 1
      %p117 = scmp.eq.s32.totalorder %s16, 3
      %p118 = scmp.ne.s32.totalorder %s113, %s115
      %p119 = scmp.eq.s32.totalorder %s16, 0
      %p120 = por %p118, %p119
      %p121 = scmp.ne.s32.totalorder %s113, %s115
      %p122 = scmp.eq.s32.totalorder %s21, 3
      %p123 = por %p121, %p122
      %p124 = scmp.ne.s32.totalorder %s115, %s116
      %p125 = scmp.eq.s32.totalorder %s21, 0
      %p126 = por %p124, %p125
      %p127 = scmp.ne.s32.totalorder %s115, %s116
      %p128 = scmp.eq.s32.totalorder %s22, 3
      %p129 = por %p127, %p128
      %p131 = scmp.ne.s32.totalorder %s116, %s130
      %p132 = scmp.eq.s32.totalorder %s22, 0
      %p133 = por %p131, %p132
      %s135 = sadd.s32 %s134, 1
      %p138 = scmp.eq.s32.totalorder %s16, 3
      %p139 = scmp.ne.s32.totalorder %s134, %s136
      %p140 = scmp.eq.s32.totalorder %s16, 0
      %p141 = por %p139, %p140
      %p142 = scmp.ne.s32.totalorder %s134, %s136
      %p143 = scmp.eq.s32.totalorder %s21, 3
      %p144 = por %p142, %p143
      %p145 = scmp.ne.s32.totalorder %s136, %s137
      %p146 = scmp.eq.s32.totalorder %s21, 0
      %p147 = por %p145, %p146
      %p148 = scmp.ne.s32.totalorder %s136, %s137
      %p149 = scmp.eq.s32.totalorder %s22, 3
      %p150 = por %p148, %p149
      %p152 = scmp.ne.s32.totalorder %s137, %s151
      %p153 = scmp.eq.s32.totalorder %s22, 0
      %p154 = por %p152, %p153
      %s156 = sadd.s32 %s155, 1
      %p159 = scmp.eq.s32.totalorder %s16, 3
      %p160 = scmp.ne.s32.totalorder %s155, %s157
      %p161 = scmp.eq.s32.totalorder %s16, 0
      %p162 = por %p160, %p161
      %p163 = scmp.ne.s32.totalorder %s155, %s157
      %p164 = scmp.eq.s32.totalorder %s21, 3
      %p165 = por %p163, %p164
      %p166 = scmp.ne.s32.totalorder %s157, %s158
      %p167 = scmp.eq.s32.totalorder %s21, 0
      %p168 = por %p166, %p167
      %p169 = scmp.ne.s32.totalorder %s157, %s158
      %p170 = scmp.eq.s32.totalorder %s22, 3
      %p171 = por %p169, %p170
      %p173 = scmp.ne.s32.totalorder %s158, %s172
      %p174 = scmp.eq.s32.totalorder %s22, 0
      %p175 = por %p173, %p174
      %s176 = ssub.s32 %s16, %s23
      %p177 = scmp.eq.s32.totalorder %s176, 0
      %s179 = sadd.s32 %s178, 1
      %s180 = scalar_select %p177, %s178, %s179
      %p183 = pneg %p177
      %p184 = scmp.eq.s32.totalorder %s16, 3
      %p185 = por %p183, %p184
      %p186 = scmp.ne.s32.totalorder %s178, %s181
      %p187 = scmp.eq.s32.totalorder %s16, 0
      %p188 = por %p186, %p187
      %p189 = scmp.ne.s32.totalorder %s178, %s181
      %p190 = scmp.eq.s32.totalorder %s21, 3
      %p191 = por %p189, %p190
      %p192 = scmp.ne.s32.totalorder %s181, %s182
      %p193 = scmp.eq.s32.totalorder %s21, 0
      %p194 = por %p192, %p193
      %p195 = scmp.ne.s32.totalorder %s181, %s182
      %p196 = scmp.eq.s32.totalorder %s22, 3
      %p197 = por %p195, %p196
      %p199 = scmp.ne.s32.totalorder %s182, %s198
      %p200 = scmp.eq.s32.totalorder %s22, 0
      %p201 = por %p199, %p200
      %p202 = scmp.le.s32.totalorder 1, %s16
      %p203 = scmp.lt.s32.totalorder %s16, 5
      %p204 = pnand %p202, %p203
      %p205 = pneg %p204
      // Predicated region
      $region9: #{tpu_custom_call.1} parent=5 // pred_check
        _
      $region10: #{tpu_custom_call.1} parent=5 // pred_check_branch
        %207 = sbr.rel (%p204) target = $region12
      $region11: #{tpu_custom_call.1} parent=5 // pred_region
        %s208 = ssub.s32 %s16, 1
        // Predicated region
        $region13: #{tpu_custom_call.1} parent=11 // pred_check
          %p209 = pneg %p63
        $region14: #{tpu_custom_call.1} parent=11 // pred_check_branch
          %211 = sbr.rel (%p209) target = $region16
        $region15: #{tpu_custom_call.1} parent=11 // pred_region
          _
        $region16: #{tpu_custom_call.1} parent=11 // pred_fallthru
          _
        // Predicated region
        $region17: #{tpu_custom_call.1} parent=11 // pred_check
          %p212 = pneg %p84
        $region18: #{tpu_custom_call.1} parent=11 // pred_check_branch
          %214 = sbr.rel (%p212) target = $region20
        $region19: #{tpu_custom_call.1} parent=11 // pred_region
          _
        $region20: #{tpu_custom_call.1} parent=11 // pred_fallthru
          _
        // Predicated region
        $region21: #{tpu_custom_call.1} parent=11 // pred_check
          %p215 = pneg %p105
        $region22: #{tpu_custom_call.1} parent=11 // pred_check_branch
          %217 = sbr.rel (%p215) target = $region24
        $region23: #{tpu_custom_call.1} parent=11 // pred_region
          _
        $region24: #{tpu_custom_call.1} parent=11 // pred_fallthru
          _
        // Predicated region
        $region25: #{tpu_custom_call.1} parent=11 // pred_check
          %p218 = pneg %p126
        $region26: #{tpu_custom_call.1} parent=11 // pred_check_branch
          %220 = sbr.rel (%p218) target = $region28
        $region27: #{tpu_custom_call.1} parent=11 // pred_region
          _
        $region28: #{tpu_custom_call.1} parent=11 // pred_fallthru
          _
        // Predicated region
        $region29: #{tpu_custom_call.1} parent=11 // pred_check
          %p221 = pneg %p147
        $region30: #{tpu_custom_call.1} parent=11 // pred_check_branch
          %223 = sbr.rel (%p221) target = $region32
        $region31: #{tpu_custom_call.1} parent=11 // pred_region
          _
        $region32: #{tpu_custom_call.1} parent=11 // pred_fallthru
          _
        // Predicated region
        $region33: #{tpu_custom_call.1} parent=11 // pred_check
          %p224 = pneg %p168
        $region34: #{tpu_custom_call.1} parent=11 // pred_check_branch
          %226 = sbr.rel (%p224) target = $region36
        $region35: #{tpu_custom_call.1} parent=11 // pred_region
          _
        $region36: #{tpu_custom_call.1} parent=11 // pred_fallthru
          _
      $region12: #{tpu_custom_call.1} parent=5 // pred_fallthru
        _
      %p227 = scmp.lt.s32.totalorder %s16, 4
      // Predicated region
      $region37: #{tpu_custom_call.1} parent=5 // pred_check
        %p228 = pneg %p227
      $region38: #{tpu_custom_call.1} parent=5 // pred_check_branch
        %230 = sbr.rel (%p228) target = $region40
      $region39: #{tpu_custom_call.1} parent=5 // pred_region
        // Predicated region
        $region41: #{tpu_custom_call.1} parent=39 // pred_check
          %p231 = pneg %p36
        $region42: #{tpu_custom_call.1} parent=39 // pred_check_branch
          %233 = sbr.rel (%p231) target = $region44
        $region43: #{tpu_custom_call.1} parent=39 // pred_region
          %s234 = smul.u32 16, %s16
          %p235 = scmp.lt.s32.totalorder %s234, 63
          %s236 = scalar_select %p235, %s234, 63
          %s237 = smul.addr %s236, 8
          %s238 = scalar_lea.vmem %s0, %s237
          %s239 = smul.u32 16, %s16
        $region44: #{tpu_custom_call.1} parent=39 // pred_fallthru
          _
      $region40: #{tpu_custom_call.1} parent=5 // pred_fallthru
        _
      %p240 = scmp.le.s32.totalorder 1, %s16
      %p241 = scmp.lt.s32.totalorder %s16, 5
      %p242 = pnand %p240, %p241
      %p243 = pneg %p242
      // Predicated region
      $region45: #{tpu_custom_call.1} parent=5 // pred_check
        _
      $region46: #{tpu_custom_call.1} parent=5 // pred_check_branch
        %245 = sbr.rel (%p242) target = $region48
      $region47: #{tpu_custom_call.1} parent=5 // pred_region
        %s246 = ssub.s32 %s16, 1
        %s247 = smul.u32 16, %s21
        %p248 = scmp.lt.s32.totalorder %s247, 63
        %s249 = scalar_select %p248, %s247, 63
        %s250 = smul.addr %s249, 8
        %s251 = scalar_lea.vmem %s0, %s250
        %p252 = pneg %p42
        %p253 = pneg %p39
        %p254 = pneg %p63
        %p255 = pneg %p60
        %p256 = pneg %p84
        %p257 = pneg %p81
        %p258 = pneg %p105
        %p259 = pneg %p102
        %p260 = pneg %p126
        %p261 = pneg %p123
        %p262 = pneg %p147
        %p263 = pneg %p144
        %p264 = pneg %p168
        %p265 = pneg %p165
        %p266 = pneg %p194
        %p267 = pneg %p191
        %s268 = sand.u32 %s181, 1
        %s269 = scalar_lea.sflag [#allocation3], %s268
        %s270 = sand.u32 %s181, 1
        %s271 = smul.addr %s270, 128
        %s272 = scalar_lea.vmem [#allocation2], %s271
        %s273 = smul.u32 16, %s21
        %p274 = scmp.lt.s32.totalorder %s273, 63
        %s275 = scalar_select %p274, %s273, 63
        %s276 = smul.addr %s275, 8
        %s277 = scalar_lea.vmem %s0, %s276
        %s278 = smul.u32 16, %s21
        %s279 = smul.u32 16, %s21
        %v280 = vld [vmem:[%s277] sm:$0xff]
        %v281 = vld [vmem:[%s277 + $0x8] sm:$0xff]
        %v282 = vld [vmem:[%s277 + $0x10] sm:$0xff]
        %v283 = vld [vmem:[%s277 + $0x18] sm:$0xff]
        %v284 = vld [vmem:[%s277 + $0x20] sm:$0xff]
        %v285 = vld [vmem:[%s277 + $0x28] sm:$0xff]
        %v286 = vld [vmem:[%s277 + $0x30] sm:$0xff]
        %v287 = vld [vmem:[%s277 + $0x38] sm:$0xff]
        %v288 = vld [vmem:[%s277 + $0x40] sm:$0xff]
        %v289 = vld [vmem:[%s277 + $0x48] sm:$0xff]
        %v290 = vld [vmem:[%s277 + $0x50] sm:$0xff]
        %v291 = vld [vmem:[%s277 + $0x58] sm:$0xff]
        %v292 = vld [vmem:[%s277 + $0x60] sm:$0xff]
        %v293 = vld [vmem:[%s277 + $0x68] sm:$0xff]
        %v294 = vld [vmem:[%s277 + $0x70] sm:$0xff]
        %v295 = vld [vmem:[%s277 + $0x78] sm:$0xff]
        %v296 = vmul.f32 %v280, %v280
        %v297 = vmul.f32 %v281, %v281
        %v298 = vmul.f32 %v282, %v282
        %v299 = vmul.f32 %v283, %v283
        %v300 = vmul.f32 %v284, %v284
        %v301 = vmul.f32 %v285, %v285
        %v302 = vmul.f32 %v286, %v286
        %v303 = vmul.f32 %v287, %v287
        %v304 = vmul.f32 %v288, %v288
        %v305 = vmul.f32 %v289, %v289
        %v306 = vmul.f32 %v290, %v290
        %v307 = vmul.f32 %v291, %v291
        %v308 = vmul.f32 %v292, %v292
        %v309 = vmul.f32 %v293, %v293
        %v310 = vmul.f32 %v294, %v294
        %v311 = vmul.f32 %v295, %v295
        %vm312 = vcmask 261120
        %v313 = vsel %vm312, %v296, 0.0
        %314 = vadd.xlane.f32.xlu0 %v313
        %v315 = vpop.xlane.xlu0 %314
        %v316 = vsel %vm312, %v297, 0.0
        %317 = vadd.xlane.f32.xlu0 %v316
        %v318 = vpop.xlane.xlu0 %317
        %v319 = vsel %vm312, %v298, 0.0
        %320 = vadd.xlane.f32.xlu0 %v319
        %v321 = vpop.xlane.xlu0 %320
        %v322 = vsel %vm312, %v299, 0.0
        %323 = vadd.xlane.f32.xlu0 %v322
        %v324 = vpop.xlane.xlu0 %323
        %v325 = vsel %vm312, %v300, 0.0
        %326 = vadd.xlane.f32.xlu0 %v325
        %v327 = vpop.xlane.xlu0 %326
        %v328 = vsel %vm312, %v301, 0.0
        %329 = vadd.xlane.f32.xlu0 %v328
        %v330 = vpop.xlane.xlu0 %329
        %v331 = vsel %vm312, %v302, 0.0
        %332 = vadd.xlane.f32.xlu0 %v331
        %v333 = vpop.xlane.xlu0 %332
        %v334 = vsel %vm312, %v303, 0.0
        %335 = vadd.xlane.f32.xlu0 %v334
        %v336 = vpop.xlane.xlu0 %335
        %v337 = vsel %vm312, %v304, 0.0
        %338 = vadd.xlane.f32.xlu0 %v337
        %v339 = vpop.xlane.xlu0 %338
        %v340 = vsel %vm312, %v305, 0.0
        %341 = vadd.xlane.f32.xlu0 %v340
        %v342 = vpop.xlane.xlu0 %341
        %v343 = vsel %vm312, %v306, 0.0
        %344 = vadd.xlane.f32.xlu0 %v343
        %v345 = vpop.xlane.xlu0 %344
        %v346 = vsel %vm312, %v307, 0.0
        %347 = vadd.xlane.f32.xlu0 %v346
        %v348 = vpop.xlane.xlu0 %347
        %v349 = vsel %vm312, %v308, 0.0
        %350 = vadd.xlane.f32.xlu0 %v349
        %v351 = vpop.xlane.xlu0 %350
        %v352 = vsel %vm312, %v309, 0.0
        %353 = vadd.xlane.f32.xlu0 %v352
        %v354 = vpop.xlane.xlu0 %353
        %v355 = vsel %vm312, %v310, 0.0
        %356 = vadd.xlane.f32.xlu0 %v355
        %v357 = vpop.xlane.xlu0 %356
        %v358 = vsel %vm312, %v311, 0.0
        %359 = vadd.xlane.f32.xlu0 %v358
        %v360 = vpop.xlane.xlu0 %359
        %v361 = vmax.f32 %v315, 1e-24
        %v362 = vmax.f32 %v318, 1e-24
        %v363 = vmax.f32 %v321, 1e-24
        %v364 = vmax.f32 %v324, 1e-24
        %v365 = vmax.f32 %v327, 1e-24
        %v366 = vmax.f32 %v330, 1e-24
        %v367 = vmax.f32 %v333, 1e-24
        %v368 = vmax.f32 %v336, 1e-24
        %v369 = vmax.f32 %v339, 1e-24
        %v370 = vmax.f32 %v342, 1e-24
        %v371 = vmax.f32 %v345, 1e-24
        %v372 = vmax.f32 %v348, 1e-24
        %v373 = vmax.f32 %v351, 1e-24
        %v374 = vmax.f32 %v354, 1e-24
        %v375 = vmax.f32 %v357, 1e-24
        %v376 = vmax.f32 %v360, 1e-24
        %v377 = vrsqrt.pop %v361
        %v378 = vmul.f32 %v377, %v361
        %v379 = vmul.f32 %v378, %v377
        %v380 = vmul.f32 0.5, %v379
        %v381 = vsub.f32 1.5, %v380
        %v382 = vmul.f32 %v377, %v381
        %vm383 = vweird.f32 %v361
        %vm384 = vweird.f32 %v377
        %vm385 = vmor %vm383, %vm384
        %v386 = vsel %vm385, %v377, %v382
        %v387 = vrsqrt.pop %v362
        %v388 = vmul.f32 %v387, %v362
        %v389 = vmul.f32 %v388, %v387
        %v390 = vmul.f32 0.5, %v389
        %v391 = vsub.f32 1.5, %v390
        %v392 = vmul.f32 %v387, %v391
        %vm393 = vweird.f32 %v362
        %vm394 = vweird.f32 %v387
        %vm395 = vmor %vm393, %vm394
        %v396 = vsel %vm395, %v387, %v392
        %v397 = vrsqrt.pop %v363
        %v398 = vmul.f32 %v397, %v363
        %v399 = vmul.f32 %v398, %v397
        %v400 = vmul.f32 0.5, %v399
        %v401 = vsub.f32 1.5, %v400
        %v402 = vmul.f32 %v397, %v401
        %vm403 = vweird.f32 %v363
        %vm404 = vweird.f32 %v397
        %vm405 = vmor %vm403, %vm404
        %v406 = vsel %vm405, %v397, %v402
        %v407 = vrsqrt.pop %v364
        %v408 = vmul.f32 %v407, %v364
        %v409 = vmul.f32 %v408, %v407
        %v410 = vmul.f32 0.5, %v409
        %v411 = vsub.f32 1.5, %v410
        %v412 = vmul.f32 %v407, %v411
        %vm413 = vweird.f32 %v364
        %vm414 = vweird.f32 %v407
        %vm415 = vmor %vm413, %vm414
        %v416 = vsel %vm415, %v407, %v412
        %v417 = vrsqrt.pop %v365
        %v418 = vmul.f32 %v417, %v365
        %v419 = vmul.f32 %v418, %v417
        %v420 = vmul.f32 0.5, %v419
        %v421 = vsub.f32 1.5, %v420
        %v422 = vmul.f32 %v417, %v421
        %vm423 = vweird.f32 %v365
        %vm424 = vweird.f32 %v417
        %vm425 = vmor %vm423, %vm424
        %v426 = vsel %vm425, %v417, %v422
        %v427 = vrsqrt.pop %v366
        %v428 = vmul.f32 %v427, %v366
        %v429 = vmul.f32 %v428, %v427
        %v430 = vmul.f32 0.5, %v429
        %v431 = vsub.f32 1.5, %v430
        %v432 = vmul.f32 %v427, %v431
        %vm433 = vweird.f32 %v366
        %vm434 = vweird.f32 %v427
        %vm435 = vmor %vm433, %vm434
        %v436 = vsel %vm435, %v427, %v432
        %v437 = vrsqrt.pop %v367
        %v438 = vmul.f32 %v437, %v367
        %v439 = vmul.f32 %v438, %v437
        %v440 = vmul.f32 0.5, %v439
        %v441 = vsub.f32 1.5, %v440
        %v442 = vmul.f32 %v437, %v441
        %vm443 = vweird.f32 %v367
        %vm444 = vweird.f32 %v437
        %vm445 = vmor %vm443, %vm444
        %v446 = vsel %vm445, %v437, %v442
        %v447 = vrsqrt.pop %v368
        %v448 = vmul.f32 %v447, %v368
        %v449 = vmul.f32 %v448, %v447
        %v450 = vmul.f32 0.5, %v449
        %v451 = vsub.f32 1.5, %v450
        %v452 = vmul.f32 %v447, %v451
        %vm453 = vweird.f32 %v368
        %vm454 = vweird.f32 %v447
        %vm455 = vmor %vm453, %vm454
        %v456 = vsel %vm455, %v447, %v452
        %v457 = vrsqrt.pop %v369
        %v458 = vmul.f32 %v457, %v369
        %v459 = vmul.f32 %v458, %v457
        %v460 = vmul.f32 0.5, %v459
        %v461 = vsub.f32 1.5, %v460
        %v462 = vmul.f32 %v457, %v461
        %vm463 = vweird.f32 %v369
        %vm464 = vweird.f32 %v457
        %vm465 = vmor %vm463, %vm464
        %v466 = vsel %vm465, %v457, %v462
        %v467 = vrsqrt.pop %v370
        %v468 = vmul.f32 %v467, %v370
        %v469 = vmul.f32 %v468, %v467
        %v470 = vmul.f32 0.5, %v469
        %v471 = vsub.f32 1.5, %v470
        %v472 = vmul.f32 %v467, %v471
        %vm473 = vweird.f32 %v370
        %vm474 = vweird.f32 %v467
        %vm475 = vmor %vm473, %vm474
        %v476 = vsel %vm475, %v467, %v472
        %v477 = vrsqrt.pop %v371
        %v478 = vmul.f32 %v477, %v371
        %v479 = vmul.f32 %v478, %v477
        %v480 = vmul.f32 0.5, %v479
        %v481 = vsub.f32 1.5, %v480
        %v482 = vmul.f32 %v477, %v481
        %vm483 = vweird.f32 %v371
        %vm484 = vweird.f32 %v477
        %vm485 = vmor %vm483, %vm484
        %v486 = vsel %vm485, %v477, %v482
        %v487 = vrsqrt.pop %v372
        %v488 = vmul.f32 %v487, %v372
        %v489 = vmul.f32 %v488, %v487
        %v490 = vmul.f32 0.5, %v489
        %v491 = vsub.f32 1.5, %v490
        %v492 = vmul.f32 %v487, %v491
        %vm493 = vweird.f32 %v372
        %vm494 = vweird.f32 %v487
        %vm495 = vmor %vm493, %vm494
        %v496 = vsel %vm495, %v487, %v492
        %v497 = vrsqrt.pop %v373
        %v498 = vmul.f32 %v497, %v373
        %v499 = vmul.f32 %v498, %v497
        %v500 = vmul.f32 0.5, %v499
        %v501 = vsub.f32 1.5, %v500
        %v502 = vmul.f32 %v497, %v501
        %vm503 = vweird.f32 %v373
        %vm504 = vweird.f32 %v497
        %vm505 = vmor %vm503, %vm504
        %v506 = vsel %vm505, %v497, %v502
        %v507 = vrsqrt.pop %v374
        %v508 = vmul.f32 %v507, %v374
        %v509 = vmul.f32 %v508, %v507
        %v510 = vmul.f32 0.5, %v509
        %v511 = vsub.f32 1.5, %v510
        %v512 = vmul.f32 %v507, %v511
        %vm513 = vweird.f32 %v374
        %vm514 = vweird.f32 %v507
        %vm515 = vmor %vm513, %vm514
        %v516 = vsel %vm515, %v507, %v512
        %v517 = vrsqrt.pop %v375
        %v518 = vmul.f32 %v517, %v375
        %v519 = vmul.f32 %v518, %v517
        %v520 = vmul.f32 0.5, %v519
        %v521 = vsub.f32 1.5, %v520
        %v522 = vmul.f32 %v517, %v521
        %vm523 = vweird.f32 %v375
        %vm524 = vweird.f32 %v517
        %vm525 = vmor %vm523, %vm524
        %v526 = vsel %vm525, %v517, %v522
        %v527 = vrsqrt.pop %v376
        %v528 = vmul.f32 %v527, %v376
        %v529 = vmul.f32 %v528, %v527
        %v530 = vmul.f32 0.5, %v529
        %v531 = vsub.f32 1.5, %v530
        %v532 = vmul.f32 %v527, %v531
        %vm533 = vweird.f32 %v376
        %vm534 = vweird.f32 %v527
        %vm535 = vmor %vm533, %vm534
        %v536 = vsel %vm535, %v527, %v532
        %v537 = vmul.f32 %v280, %v386
        %v538 = vmul.f32 %v281, %v396
        %v539 = vmul.f32 %v282, %v406
        %v540 = vmul.f32 %v283, %v416
        %v541 = vmul.f32 %v284, %v426
        %v542 = vmul.f32 %v285, %v436
        %v543 = vmul.f32 %v286, %v446
        %v544 = vmul.f32 %v287, %v456
        %v545 = vmul.f32 %v288, %v466
        %v546 = vmul.f32 %v289, %v476
        %v547 = vmul.f32 %v290, %v486
        %v548 = vmul.f32 %v291, %v496
        %v549 = vmul.f32 %v292, %v506
        %v550 = vmul.f32 %v293, %v516
        %v551 = vmul.f32 %v294, %v526
        %v552 = vmul.f32 %v295, %v536
        %v553 = vld [vmem:[%s1] sm:$0xff]
        %v554 = vld [vmem:[%s1 + $0x8] sm:$0xff]
        %v555 = vld [vmem:[%s1 + $0x10] sm:$0xff]
        %v556 = vld [vmem:[%s1 + $0x18] sm:$0xff]
        %v557 = vld [vmem:[%s2] sm:$0x1]
        %v559 = vperm.slane %v557, 0
        %v562 = vsel %vm312, %v537, 0
        %v565 = vsel %vm312, %v538, 0
        %v568 = vsel %vm312, %v539, 0
        %v571 = vsel %vm312, %v540, 0
        %v574 = vsel %vm312, %v541, 0
        %v577 = vsel %vm312, %v542, 0
        %v580 = vsel %vm312, %v543, 0
        %v583 = vsel %vm312, %v544, 0
        %v586 = vsel %vm312, %v545, 0
        %v589 = vsel %vm312, %v546, 0
        %v592 = vsel %vm312, %v547, 0
        %v595 = vsel %vm312, %v548, 0
        %v598 = vsel %vm312, %v549, 0
        %v601 = vsel %vm312, %v550, 0
        %v604 = vsel %vm312, %v551, 0
        %v607 = vsel %vm312, %v552, 0
        %609 = vmatpush.msra.mxu0 0.0
        %610 = vmatpush.msra.mxu0 0.0
        %611 = vmatpush.msra.mxu0 0.0
        %612 = vmatpush.msra.mxu0 0.0
        %613 = vmatpush.msra.mxu0 0.0
        %614 = vmatpush.msra.mxu0 0.0
        %615 = vmatpush.msra.mxu0 0.0
        %616 = vmatpush.msra.mxu0 0.0
        %617 = vmatpush.msra.mxu0 0.0
        %618 = vmatpush.msra.mxu0 0.0
        %619 = vmatpush.msra.mxu0 0.0
        %620 = vmatpush.msra.mxu0 0.0
        %621 = vmatpush.msra.mxu0 %v556
        %622 = vmatpush.msra.mxu0 %v555
        %623 = vmatpush.msra.mxu0 %v554
        %624 = vmatpush.msra.mxu0 %v553
        %625 = vmatmul.f32.gmra.mxu0 %v562
        %v626 = vpop.f32.mrf.mxu0
        %v627 = vadd.f32 %v559, %v626
        %628 = vmatmul.f32.gmra.mxu0 %v565
        %v629 = vpop.f32.mrf.mxu0
        %v630 = vadd.f32 %v559, %v629
        %631 = vmatmul.f32.gmra.mxu0 %v568
        %v632 = vpop.f32.mrf.mxu0
        %v633 = vadd.f32 %v559, %v632
        %634 = vmatmul.f32.gmra.mxu0 %v571
        %v635 = vpop.f32.mrf.mxu0
        %v636 = vadd.f32 %v559, %v635
        %637 = vmatmul.f32.gmra.mxu0 %v574
        %v638 = vpop.f32.mrf.mxu0
        %v639 = vadd.f32 %v559, %v638
        %640 = vmatmul.f32.gmra.mxu0 %v577
        %v641 = vpop.f32.mrf.mxu0
        %v642 = vadd.f32 %v559, %v641
        %643 = vmatmul.f32.gmra.mxu0 %v580
        %v644 = vpop.f32.mrf.mxu0
        %v645 = vadd.f32 %v559, %v644
        %646 = vmatmul.f32.gmra.mxu0 %v583
        %v647 = vpop.f32.mrf.mxu0
        %v648 = vadd.f32 %v559, %v647
        %649 = vmatmul.f32.gmra.mxu0 %v586
        %v650 = vpop.f32.mrf.mxu0
        %v651 = vadd.f32 %v559, %v650
        %652 = vmatmul.f32.gmra.mxu0 %v589
        %v653 = vpop.f32.mrf.mxu0
        %v654 = vadd.f32 %v559, %v653
        %655 = vmatmul.f32.gmra.mxu0 %v592
        %v656 = vpop.f32.mrf.mxu0
        %v657 = vadd.f32 %v559, %v656
        %658 = vmatmul.f32.gmra.mxu0 %v595
        %v659 = vpop.f32.mrf.mxu0
        %v660 = vadd.f32 %v559, %v659
        %661 = vmatmul.f32.gmra.mxu0 %v598
        %v662 = vpop.f32.mrf.mxu0
        %v663 = vadd.f32 %v559, %v662
        %664 = vmatmul.f32.gmra.mxu0 %v601
        %v665 = vpop.f32.mrf.mxu0
        %v666 = vadd.f32 %v559, %v665
        %667 = vmatmul.f32.gmra.mxu0 %v604
        %v668 = vpop.f32.mrf.mxu0
        %v669 = vadd.f32 %v559, %v668
        %670 = vmatmul.f32.gmra.mxu0 %v607
        %v671 = vpop.f32.mrf.mxu0
        %v672 = vadd.f32 %v559, %v671
        %673 = vdwg.mxu0
        %vm674 = vcmask 523264
        %v675 = vsel %vm674, %v627, 0.0
        %676 = vadd.xlane.f32.xlu0 %v675
        %v677 = vpop.xlane.xlu0 %676
        %v678 = vsel %vm674, %v630, 0.0
        %679 = vadd.xlane.f32.xlu0 %v678
        %v680 = vpop.xlane.xlu0 %679
        %v681 = vsel %vm674, %v633, 0.0
        %682 = vadd.xlane.f32.xlu0 %v681
        %v683 = vpop.xlane.xlu0 %682
        %v684 = vsel %vm674, %v636, 0.0
        %685 = vadd.xlane.f32.xlu0 %v684
        %v686 = vpop.xlane.xlu0 %685
        %v687 = vsel %vm674, %v639, 0.0
        %688 = vadd.xlane.f32.xlu0 %v687
        %v689 = vpop.xlane.xlu0 %688
        %v690 = vsel %vm674, %v642, 0.0
        %691 = vadd.xlane.f32.xlu0 %v690
        %v692 = vpop.xlane.xlu0 %691
        %v693 = vsel %vm674, %v645, 0.0
        %694 = vadd.xlane.f32.xlu0 %v693
        %v695 = vpop.xlane.xlu0 %694
        %v696 = vsel %vm674, %v648, 0.0
        %697 = vadd.xlane.f32.xlu0 %v696
        %v698 = vpop.xlane.xlu0 %697
        %v699 = vsel %vm674, %v651, 0.0
        %700 = vadd.xlane.f32.xlu0 %v699
        %v701 = vpop.xlane.xlu0 %700
        %v702 = vsel %vm674, %v654, 0.0
        %703 = vadd.xlane.f32.xlu0 %v702
        %v704 = vpop.xlane.xlu0 %703
        %v705 = vsel %vm674, %v657, 0.0
        %706 = vadd.xlane.f32.xlu0 %v705
        %v707 = vpop.xlane.xlu0 %706
        %v708 = vsel %vm674, %v660, 0.0
        %709 = vadd.xlane.f32.xlu0 %v708
        %v710 = vpop.xlane.xlu0 %709
        %v711 = vsel %vm674, %v663, 0.0
        %712 = vadd.xlane.f32.xlu0 %v711
        %v713 = vpop.xlane.xlu0 %712
        %v714 = vsel %vm674, %v666, 0.0
        %715 = vadd.xlane.f32.xlu0 %v714
        %v716 = vpop.xlane.xlu0 %715
        %v717 = vsel %vm674, %v669, 0.0
        %718 = vadd.xlane.f32.xlu0 %v717
        %v719 = vpop.xlane.xlu0 %718
        %v720 = vsel %vm674, %v672, 0.0
        %721 = vadd.xlane.f32.xlu0 %v720
        %v722 = vpop.xlane.xlu0 %721
        %v723 = vrcp.pop 64.0
        %v724 = vmul.f32 64.0, %v723
        %v725 = vsub.f32 1.0, %v724
        %v726 = vmul.f32 %v723, %v725
        %v727 = vadd.f32 %v723, %v726
        %vm728 = vweird.f32 %v723
        %v729 = vsel %vm728, %v723, %v727
        %v730 = vmul.f32 %v677, %v729
        %v731 = vmul.f32 %v680, %v729
        %v732 = vmul.f32 %v683, %v729
        %v733 = vmul.f32 %v686, %v729
        %v734 = vmul.f32 %v689, %v729
        %v735 = vmul.f32 %v692, %v729
        %v736 = vmul.f32 %v695, %v729
        %v737 = vmul.f32 %v698, %v729
        %v738 = vmul.f32 %v701, %v729
        %v739 = vmul.f32 %v704, %v729
        %v740 = vmul.f32 %v707, %v729
        %v741 = vmul.f32 %v710, %v729
        %v742 = vmul.f32 %v713, %v729
        %v743 = vmul.f32 %v716, %v729
        %v744 = vmul.f32 %v719, %v729
        %v745 = vmul.f32 %v722, %v729
        %v746 = vsub.f32 %v627, %v730
        %v747 = vsub.f32 %v630, %v731
        %v748 = vsub.f32 %v633, %v732
        %v749 = vsub.f32 %v636, %v733
        %v750 = vsub.f32 %v639, %v734
        %v751 = vsub.f32 %v642, %v735
        %v752 = vsub.f32 %v645, %v736
        %v753 = vsub.f32 %v648, %v737
        %v754 = vsub.f32 %v651, %v738
        %v755 = vsub.f32 %v654, %v739
        %v756 = vsub.f32 %v657, %v740
        %v757 = vsub.f32 %v660, %v741
        %v758 = vsub.f32 %v663, %v742
        %v759 = vsub.f32 %v666, %v743
        %v760 = vsub.f32 %v669, %v744
        %v761 = vsub.f32 %v672, %v745
        %v762 = vmul.f32 %v746, %v746
        %v763 = vmul.f32 %v747, %v747
        %v764 = vmul.f32 %v748, %v748
        %v765 = vmul.f32 %v749, %v749
        %v766 = vmul.f32 %v750, %v750
        %v767 = vmul.f32 %v751, %v751
        %v768 = vmul.f32 %v752, %v752
        %v769 = vmul.f32 %v753, %v753
        %v770 = vmul.f32 %v754, %v754
        %v771 = vmul.f32 %v755, %v755
        %v772 = vmul.f32 %v756, %v756
        %v773 = vmul.f32 %v757, %v757
        %v774 = vmul.f32 %v758, %v758
        %v775 = vmul.f32 %v759, %v759
        %v776 = vmul.f32 %v760, %v760
        %v777 = vmul.f32 %v761, %v761
        %v778 = vsel %vm674, %v762, 0.0
        %779 = vadd.xlane.f32.xlu0 %v778
        %v780 = vpop.xlane.xlu0 %779
        %v781 = vsel %vm674, %v763, 0.0
        %782 = vadd.xlane.f32.xlu0 %v781
        %v783 = vpop.xlane.xlu0 %782
        %v784 = vsel %vm674, %v764, 0.0
        %785 = vadd.xlane.f32.xlu0 %v784
        %v786 = vpop.xlane.xlu0 %785
        %v787 = vsel %vm674, %v765, 0.0
        %788 = vadd.xlane.f32.xlu0 %v787
        %v789 = vpop.xlane.xlu0 %788
        %v790 = vsel %vm674, %v766, 0.0
        %791 = vadd.xlane.f32.xlu0 %v790
        %v792 = vpop.xlane.xlu0 %791
        %v793 = vsel %vm674, %v767, 0.0
        %794 = vadd.xlane.f32.xlu0 %v793
        %v795 = vpop.xlane.xlu0 %794
        %v796 = vsel %vm674, %v768, 0.0
        %797 = vadd.xlane.f32.xlu0 %v796
        %v798 = vpop.xlane.xlu0 %797
        %v799 = vsel %vm674, %v769, 0.0
        %800 = vadd.xlane.f32.xlu0 %v799
        %v801 = vpop.xlane.xlu0 %800
        %v802 = vsel %vm674, %v770, 0.0
        %803 = vadd.xlane.f32.xlu0 %v802
        %v804 = vpop.xlane.xlu0 %803
        %v805 = vsel %vm674, %v771, 0.0
        %806 = vadd.xlane.f32.xlu0 %v805
        %v807 = vpop.xlane.xlu0 %806
        %v808 = vsel %vm674, %v772, 0.0
        %809 = vadd.xlane.f32.xlu0 %v808
        %v810 = vpop.xlane.xlu0 %809
        %v811 = vsel %vm674, %v773, 0.0
        %812 = vadd.xlane.f32.xlu0 %v811
        %v813 = vpop.xlane.xlu0 %812
        %v814 = vsel %vm674, %v774, 0.0
        %815 = vadd.xlane.f32.xlu0 %v814
        %v816 = vpop.xlane.xlu0 %815
        %v817 = vsel %vm674, %v775, 0.0
        %818 = vadd.xlane.f32.xlu0 %v817
        %v819 = vpop.xlane.xlu0 %818
        %v820 = vsel %vm674, %v776, 0.0
        %821 = vadd.xlane.f32.xlu0 %v820
        %v822 = vpop.xlane.xlu0 %821
        %v823 = vsel %vm674, %v777, 0.0
        %824 = vadd.xlane.f32.xlu0 %v823
        %v825 = vpop.xlane.xlu0 %824
        %v826 = vmul.f32 %v780, %v729
        %v827 = vmul.f32 %v783, %v729
        %v828 = vmul.f32 %v786, %v729
        %v829 = vmul.f32 %v789, %v729
        %v830 = vmul.f32 %v792, %v729
        %v831 = vmul.f32 %v795, %v729
        %v832 = vmul.f32 %v798, %v729
        %v833 = vmul.f32 %v801, %v729
        %v834 = vmul.f32 %v804, %v729
        %v835 = vmul.f32 %v807, %v729
        %v836 = vmul.f32 %v810, %v729
        %v837 = vmul.f32 %v813, %v729
        %v838 = vmul.f32 %v816, %v729
        %v839 = vmul.f32 %v819, %v729
        %v840 = vmul.f32 %v822, %v729
        %v841 = vmul.f32 %v825, %v729
        %v842 = vadd.f32 %v826, 1e-05
        %v843 = vadd.f32 %v827, 1e-05
        %v844 = vadd.f32 %v828, 1e-05
        %v845 = vadd.f32 %v829, 1e-05
        %v846 = vadd.f32 %v830, 1e-05
        %v847 = vadd.f32 %v831, 1e-05
        %v848 = vadd.f32 %v832, 1e-05
        %v849 = vadd.f32 %v833, 1e-05
        %v850 = vadd.f32 %v834, 1e-05
        %v851 = vadd.f32 %v835, 1e-05
        %v852 = vadd.f32 %v836, 1e-05
        %v853 = vadd.f32 %v837, 1e-05
        %v854 = vadd.f32 %v838, 1e-05
        %v855 = vadd.f32 %v839, 1e-05
        %v856 = vadd.f32 %v840, 1e-05
        %v857 = vadd.f32 %v841, 1e-05
        %v858 = vrsqrt.pop %v842
        %v859 = vmul.f32 %v858, %v842
        %v860 = vmul.f32 %v859, %v858
        %v861 = vmul.f32 0.5, %v860
        %v862 = vsub.f32 1.5, %v861
        %v863 = vmul.f32 %v858, %v862
        %vm864 = vweird.f32 %v842
        %vm865 = vweird.f32 %v858
        %vm866 = vmor %vm864, %vm865
        %v867 = vsel %vm866, %v858, %v863
        %v868 = vrsqrt.pop %v843
        %v869 = vmul.f32 %v868, %v843
        %v870 = vmul.f32 %v869, %v868
        %v871 = vmul.f32 0.5, %v870
        %v872 = vsub.f32 1.5, %v871
        %v873 = vmul.f32 %v868, %v872
        %vm874 = vweird.f32 %v843
        %vm875 = vweird.f32 %v868
        %vm876 = vmor %vm874, %vm875
        %v877 = vsel %vm876, %v868, %v873
        %v878 = vrsqrt.pop %v844
        %v879 = vmul.f32 %v878, %v844
        %v880 = vmul.f32 %v879, %v878
        %v881 = vmul.f32 0.5, %v880
        %v882 = vsub.f32 1.5, %v881
        %v883 = vmul.f32 %v878, %v882
        %vm884 = vweird.f32 %v844
        %vm885 = vweird.f32 %v878
        %vm886 = vmor %vm884, %vm885
        %v887 = vsel %vm886, %v878, %v883
        %v888 = vrsqrt.pop %v845
        %v889 = vmul.f32 %v888, %v845
        %v890 = vmul.f32 %v889, %v888
        %v891 = vmul.f32 0.5, %v890
        %v892 = vsub.f32 1.5, %v891
        %v893 = vmul.f32 %v888, %v892
        %vm894 = vweird.f32 %v845
        %vm895 = vweird.f32 %v888
        %vm896 = vmor %vm894, %vm895
        %v897 = vsel %vm896, %v888, %v893
        %v898 = vrsqrt.pop %v846
        %v899 = vmul.f32 %v898, %v846
        %v900 = vmul.f32 %v899, %v898
        %v901 = vmul.f32 0.5, %v900
        %v902 = vsub.f32 1.5, %v901
        %v903 = vmul.f32 %v898, %v902
        %vm904 = vweird.f32 %v846
        %vm905 = vweird.f32 %v898
        %vm906 = vmor %vm904, %vm905
        %v907 = vsel %vm906, %v898, %v903
        %v908 = vrsqrt.pop %v847
        %v909 = vmul.f32 %v908, %v847
        %v910 = vmul.f32 %v909, %v908
        %v911 = vmul.f32 0.5, %v910
        %v912 = vsub.f32 1.5, %v911
        %v913 = vmul.f32 %v908, %v912
        %vm914 = vweird.f32 %v847
        %vm915 = vweird.f32 %v908
        %vm916 = vmor %vm914, %vm915
        %v917 = vsel %vm916, %v908, %v913
        %v918 = vrsqrt.pop %v848
        %v919 = vmul.f32 %v918, %v848
        %v920 = vmul.f32 %v919, %v918
        %v921 = vmul.f32 0.5, %v920
        %v922 = vsub.f32 1.5, %v921
        %v923 = vmul.f32 %v918, %v922
        %vm924 = vweird.f32 %v848
        %vm925 = vweird.f32 %v918
        %vm926 = vmor %vm924, %vm925
        %v927 = vsel %vm926, %v918, %v923
        %v928 = vrsqrt.pop %v849
        %v929 = vmul.f32 %v928, %v849
        %v930 = vmul.f32 %v929, %v928
        %v931 = vmul.f32 0.5, %v930
        %v932 = vsub.f32 1.5, %v931
        %v933 = vmul.f32 %v928, %v932
        %vm934 = vweird.f32 %v849
        %vm935 = vweird.f32 %v928
        %vm936 = vmor %vm934, %vm935
        %v937 = vsel %vm936, %v928, %v933
        %v938 = vrsqrt.pop %v850
        %v939 = vmul.f32 %v938, %v850
        %v940 = vmul.f32 %v939, %v938
        %v941 = vmul.f32 0.5, %v940
        %v942 = vsub.f32 1.5, %v941
        %v943 = vmul.f32 %v938, %v942
        %vm944 = vweird.f32 %v850
        %vm945 = vweird.f32 %v938
        %vm946 = vmor %vm944, %vm945
        %v947 = vsel %vm946, %v938, %v943
        %v948 = vrsqrt.pop %v851
        %v949 = vmul.f32 %v948, %v851
        %v950 = vmul.f32 %v949, %v948
        %v951 = vmul.f32 0.5, %v950
        %v952 = vsub.f32 1.5, %v951
        %v953 = vmul.f32 %v948, %v952
        %vm954 = vweird.f32 %v851
        %vm955 = vweird.f32 %v948
        %vm956 = vmor %vm954, %vm955
        %v957 = vsel %vm956, %v948, %v953
        %v958 = vrsqrt.pop %v852
        %v959 = vmul.f32 %v958, %v852
        %v960 = vmul.f32 %v959, %v958
        %v961 = vmul.f32 0.5, %v960
        %v962 = vsub.f32 1.5, %v961
        %v963 = vmul.f32 %v958, %v962
        %vm964 = vweird.f32 %v852
        %vm965 = vweird.f32 %v958
        %vm966 = vmor %vm964, %vm965
        %v967 = vsel %vm966, %v958, %v963
        %v968 = vrsqrt.pop %v853
        %v969 = vmul.f32 %v968, %v853
        %v970 = vmul.f32 %v969, %v968
        %v971 = vmul.f32 0.5, %v970
        %v972 = vsub.f32 1.5, %v971
        %v973 = vmul.f32 %v968, %v972
        %vm974 = vweird.f32 %v853
        %vm975 = vweird.f32 %v968
        %vm976 = vmor %vm974, %vm975
        %v977 = vsel %vm976, %v968, %v973
        %v978 = vrsqrt.pop %v854
        %v979 = vmul.f32 %v978, %v854
        %v980 = vmul.f32 %v979, %v978
        %v981 = vmul.f32 0.5, %v980
        %v982 = vsub.f32 1.5, %v981
        %v983 = vmul.f32 %v978, %v982
        %vm984 = vweird.f32 %v854
        %vm985 = vweird.f32 %v978
        %vm986 = vmor %vm984, %vm985
        %v987 = vsel %vm986, %v978, %v983
        %v988 = vrsqrt.pop %v855
        %v989 = vmul.f32 %v988, %v855
        %v990 = vmul.f32 %v989, %v988
        %v991 = vmul.f32 0.5, %v990
        %v992 = vsub.f32 1.5, %v991
        %v993 = vmul.f32 %v988, %v992
        %vm994 = vweird.f32 %v855
        %vm995 = vweird.f32 %v988
        %vm996 = vmor %vm994, %vm995
        %v997 = vsel %vm996, %v988, %v993
        %v998 = vrsqrt.pop %v856
        %v999 = vmul.f32 %v998, %v856
        %v1000 = vmul.f32 %v999, %v998
        %v1001 = vmul.f32 0.5, %v1000
        %v1002 = vsub.f32 1.5, %v1001
        %v1003 = vmul.f32 %v998, %v1002
        %vm1004 = vweird.f32 %v856
        %vm1005 = vweird.f32 %v998
        %vm1006 = vmor %vm1004, %vm1005
        %v1007 = vsel %vm1006, %v998, %v1003
        %v1008 = vrsqrt.pop %v857
        %v1009 = vmul.f32 %v1008, %v857
        %v1010 = vmul.f32 %v1009, %v1008
        %v1011 = vmul.f32 0.5, %v1010
        %v1012 = vsub.f32 1.5, %v1011
        %v1013 = vmul.f32 %v1008, %v1012
        %vm1014 = vweird.f32 %v857
        %vm1015 = vweird.f32 %v1008
        %vm1016 = vmor %vm1014, %vm1015
        %v1017 = vsel %vm1016, %v1008, %v1013
        %v1018 = vmul.f32 %v746, %v867
        %v1019 = vmul.f32 %v747, %v877
        %v1020 = vmul.f32 %v748, %v887
        %v1021 = vmul.f32 %v749, %v897
        %v1022 = vmul.f32 %v750, %v907
        %v1023 = vmul.f32 %v751, %v917
        %v1024 = vmul.f32 %v752, %v927
        %v1025 = vmul.f32 %v753, %v937
        %v1026 = vmul.f32 %v754, %v947
        %v1027 = vmul.f32 %v755, %v957
        %v1028 = vmul.f32 %v756, %v967
        %v1029 = vmul.f32 %v757, %v977
        %v1030 = vmul.f32 %v758, %v987
        %v1031 = vmul.f32 %v759, %v997
        %v1032 = vmul.f32 %v760, %v1007
        %v1033 = vmul.f32 %v761, %v1017
        %v1034 = vld [vmem:[%s3] sm:$0x1]
        %v1036 = vperm.slane %v1034, 0
        %v1038 = vmul.f32 %v1018, %v1036
        %v1039 = vmul.f32 %v1019, %v1036
        %v1040 = vmul.f32 %v1020, %v1036
        %v1041 = vmul.f32 %v1021, %v1036
        %v1042 = vmul.f32 %v1022, %v1036
        %v1043 = vmul.f32 %v1023, %v1036
        %v1044 = vmul.f32 %v1024, %v1036
        %v1045 = vmul.f32 %v1025, %v1036
        %v1046 = vmul.f32 %v1026, %v1036
        %v1047 = vmul.f32 %v1027, %v1036
        %v1048 = vmul.f32 %v1028, %v1036
        %v1049 = vmul.f32 %v1029, %v1036
        %v1050 = vmul.f32 %v1030, %v1036
        %v1051 = vmul.f32 %v1031, %v1036
        %v1052 = vmul.f32 %v1032, %v1036
        %v1053 = vmul.f32 %v1033, %v1036
        %v1054 = vld [vmem:[%s4] sm:$0x1]
        %v1056 = vperm.slane %v1054, 0
        %v1058 = vadd.f32 %v1038, %v1056
        %v1059 = vadd.f32 %v1039, %v1056
        %v1060 = vadd.f32 %v1040, %v1056
        %v1061 = vadd.f32 %v1041, %v1056
        %v1062 = vadd.f32 %v1042, %v1056
        %v1063 = vadd.f32 %v1043, %v1056
        %v1064 = vadd.f32 %v1044, %v1056
        %v1065 = vadd.f32 %v1045, %v1056
        %v1066 = vadd.f32 %v1046, %v1056
        %v1067 = vadd.f32 %v1047, %v1056
        %v1068 = vadd.f32 %v1048, %v1056
        %v1069 = vadd.f32 %v1049, %v1056
        %v1070 = vadd.f32 %v1050, %v1056
        %v1071 = vadd.f32 %v1051, %v1056
        %v1072 = vadd.f32 %v1052, %v1056
        %v1073 = vadd.f32 %v1053, %v1056
        %v1074 = vmul.f32 %v1058, 0.5
        %v1075 = vmul.f32 %v1059, 0.5
        %v1076 = vmul.f32 %v1060, 0.5
        %v1077 = vmul.f32 %v1061, 0.5
        %v1078 = vmul.f32 %v1062, 0.5
        %v1079 = vmul.f32 %v1063, 0.5
        %v1080 = vmul.f32 %v1064, 0.5
        %v1081 = vmul.f32 %v1065, 0.5
        %v1082 = vmul.f32 %v1066, 0.5
        %v1083 = vmul.f32 %v1067, 0.5
        %v1084 = vmul.f32 %v1068, 0.5
        %v1085 = vmul.f32 %v1069, 0.5
        %v1086 = vmul.f32 %v1070, 0.5
        %v1087 = vmul.f32 %v1071, 0.5
        %v1088 = vmul.f32 %v1072, 0.5
        %v1089 = vmul.f32 %v1073, 0.5
        %v1090 = vmul.f32 %v1058, 0.70710677
        %v1091 = vmul.f32 %v1059, 0.70710677
        %v1092 = vmul.f32 %v1060, 0.70710677
        %v1093 = vmul.f32 %v1061, 0.70710677
        %v1094 = vmul.f32 %v1062, 0.70710677
        %v1095 = vmul.f32 %v1063, 0.70710677
        %v1096 = vmul.f32 %v1064, 0.70710677
        %v1097 = vmul.f32 %v1065, 0.70710677
        %v1098 = vmul.f32 %v1066, 0.70710677
        %v1099 = vmul.f32 %v1067, 0.70710677
        %v1100 = vmul.f32 %v1068, 0.70710677
        %v1101 = vmul.f32 %v1069, 0.70710677
        %v1102 = vmul.f32 %v1070, 0.70710677
        %v1103 = vmul.f32 %v1071, 0.70710677
        %v1104 = vmul.f32 %v1072, 0.70710677
        %v1105 = vmul.f32 %v1073, 0.70710677
        %v1106 = vmul.f32 %v1090, %v1090
        %v1107 = vmin.f32 16.0, %v1106
        %v1108 = vmul.f32 %v1107, 2.1237322e-06
        %v1109 = vadd.f32 %v1108, 0.00028619796
        %v1110 = vmul.f32 %v1107, %v1109
        %v1111 = vadd.f32 %v1110, 0.0036580483
        %v1112 = vmul.f32 %v1107, %v1111
        %v1113 = vadd.f32 %v1112, 0.05243302
        %v1114 = vmul.f32 %v1107, %v1113
        %v1115 = vadd.f32 %v1114, 0.18741608
        %v1116 = vmul.f32 %v1107, %v1115
        %v1117 = vadd.f32 %v1116, 1.1283791
        %v1118 = vmul.f32 %v1090, %v1117
        %v1119 = vmul.f32 %v1107, 3.8918573e-05
        %v1120 = vadd.f32 %v1119, 0.001143296
        %v1121 = vmul.f32 %v1107, %v1120
        %v1122 = vadd.f32 %v1121, 0.014752088
        %v1123 = vmul.f32 %v1107, %v1122
        %v1124 = vadd.f32 %v1123, 0.112945676
        %v1125 = vmul.f32 %v1107, %v1124
        %v1126 = vadd.f32 %v1125, 0.4994258
        %v1127 = vmul.f32 %v1107, %v1126
        %v1128 = vadd.f32 %v1127, 1.0
        %v1129 = vrcp.pop %v1128
        %v1130 = vmul.f32 %v1128, %v1129
        %v1131 = vsub.f32 1.0, %v1130
        %v1132 = vmul.f32 %v1129, %v1131
        %v1133 = vadd.f32 %v1129, %v1132
        %vm1134 = vweird.f32 %v1128
        %vm1135 = vweird.f32 %v1129
        %vm1136 = vmor %vm1134, %vm1135
        %v1137 = vsel %vm1136, %v1129, %v1133
        %v1138 = vand.u32 2147483647, %v1128
        %vm1139 = vcmp.eq.f32.partialorder %v1138, 8.507059e+37
        %v1140 = vand.u32 %v1128, 2147483648
        %v1141 = vor.u32 1.1754944e-38, %v1140
        %v1142 = vsel %vm1139, %v1141, %v1137
        %v1143 = vmul.f32 %v1118, %v1142
        %v1144 = vmin.f32 %v1143, 1.0
        %v1145 = vmax.f32 %v1144, -1.0
        %v1146 = vmul.f32 %v1091, %v1091
        %v1147 = vmin.f32 16.0, %v1146
        %v1148 = vmul.f32 %v1147, 2.1237322e-06
        %v1149 = vadd.f32 %v1148, 0.00028619796
        %v1150 = vmul.f32 %v1147, %v1149
        %v1151 = vadd.f32 %v1150, 0.0036580483
        %v1152 = vmul.f32 %v1147, %v1151
        %v1153 = vadd.f32 %v1152, 0.05243302
        %v1154 = vmul.f32 %v1147, %v1153
        %v1155 = vadd.f32 %v1154, 0.18741608
        %v1156 = vmul.f32 %v1147, %v1155
        %v1157 = vadd.f32 %v1156, 1.1283791
        %v1158 = vmul.f32 %v1091, %v1157
        %v1159 = vmul.f32 %v1147, 3.8918573e-05
        %v1160 = vadd.f32 %v1159, 0.001143296
        %v1161 = vmul.f32 %v1147, %v1160
        %v1162 = vadd.f32 %v1161, 0.014752088
        %v1163 = vmul.f32 %v1147, %v1162
        %v1164 = vadd.f32 %v1163, 0.112945676
        %v1165 = vmul.f32 %v1147, %v1164
        %v1166 = vadd.f32 %v1165, 0.4994258
        %v1167 = vmul.f32 %v1147, %v1166
        %v1168 = vadd.f32 %v1167, 1.0
        %v1169 = vrcp.pop %v1168
        %v1170 = vmul.f32 %v1168, %v1169
        %v1171 = vsub.f32 1.0, %v1170
        %v1172 = vmul.f32 %v1169, %v1171
        %v1173 = vadd.f32 %v1169, %v1172
        %vm1174 = vweird.f32 %v1168
        %vm1175 = vweird.f32 %v1169
        %vm1176 = vmor %vm1174, %vm1175
        %v1177 = vsel %vm1176, %v1169, %v1173
        %v1178 = vand.u32 2147483647, %v1168
        %vm1179 = vcmp.eq.f32.partialorder %v1178, 8.507059e+37
        %v1180 = vand.u32 %v1168, 2147483648
        %v1181 = vor.u32 1.1754944e-38, %v1180
        %v1182 = vsel %vm1179, %v1181, %v1177
        %v1183 = vmul.f32 %v1158, %v1182
        %v1184 = vmin.f32 %v1183, 1.0
        %v1185 = vmax.f32 %v1184, -1.0
        %v1186 = vmul.f32 %v1092, %v1092
        %v1187 = vmin.f32 16.0, %v1186
        %v1188 = vmul.f32 %v1187, 2.1237322e-06
        %v1189 = vadd.f32 %v1188, 0.00028619796
        %v1190 = vmul.f32 %v1187, %v1189
        %v1191 = vadd.f32 %v1190, 0.0036580483
        %v1192 = vmul.f32 %v1187, %v1191
        %v1193 = vadd.f32 %v1192, 0.05243302
        %v1194 = vmul.f32 %v1187, %v1193
        %v1195 = vadd.f32 %v1194, 0.18741608
        %v1196 = vmul.f32 %v1187, %v1195
        %v1197 = vadd.f32 %v1196, 1.1283791
        %v1198 = vmul.f32 %v1092, %v1197
        %v1199 = vmul.f32 %v1187, 3.8918573e-05
        %v1200 = vadd.f32 %v1199, 0.001143296
        %v1201 = vmul.f32 %v1187, %v1200
        %v1202 = vadd.f32 %v1201, 0.014752088
        %v1203 = vmul.f32 %v1187, %v1202
        %v1204 = vadd.f32 %v1203, 0.112945676
        %v1205 = vmul.f32 %v1187, %v1204
        %v1206 = vadd.f32 %v1205, 0.4994258
        %v1207 = vmul.f32 %v1187, %v1206
        %v1208 = vadd.f32 %v1207, 1.0
        %v1209 = vrcp.pop %v1208
        %v1210 = vmul.f32 %v1208, %v1209
        %v1211 = vsub.f32 1.0, %v1210
        %v1212 = vmul.f32 %v1209, %v1211
        %v1213 = vadd.f32 %v1209, %v1212
        %vm1214 = vweird.f32 %v1208
        %vm1215 = vweird.f32 %v1209
        %vm1216 = vmor %vm1214, %vm1215
        %v1217 = vsel %vm1216, %v1209, %v1213
        %v1218 = vand.u32 2147483647, %v1208
        %vm1219 = vcmp.eq.f32.partialorder %v1218, 8.507059e+37
        %v1220 = vand.u32 %v1208, 2147483648
        %v1221 = vor.u32 1.1754944e-38, %v1220
        %v1222 = vsel %vm1219, %v1221, %v1217
        %v1223 = vmul.f32 %v1198, %v1222
        %v1224 = vmin.f32 %v1223, 1.0
        %v1225 = vmax.f32 %v1224, -1.0
        %v1226 = vmul.f32 %v1093, %v1093
        %v1227 = vmin.f32 16.0, %v1226
        %v1228 = vmul.f32 %v1227, 2.1237322e-06
        %v1229 = vadd.f32 %v1228, 0.00028619796
        %v1230 = vmul.f32 %v1227, %v1229
        %v1231 = vadd.f32 %v1230, 0.0036580483
        %v1232 = vmul.f32 %v1227, %v1231
        %v1233 = vadd.f32 %v1232, 0.05243302
        %v1234 = vmul.f32 %v1227, %v1233
        %v1235 = vadd.f32 %v1234, 0.18741608
        %v1236 = vmul.f32 %v1227, %v1235
        %v1237 = vadd.f32 %v1236, 1.1283791
        %v1238 = vmul.f32 %v1093, %v1237
        %v1239 = vmul.f32 %v1227, 3.8918573e-05
        %v1240 = vadd.f32 %v1239, 0.001143296
        %v1241 = vmul.f32 %v1227, %v1240
        %v1242 = vadd.f32 %v1241, 0.014752088
        %v1243 = vmul.f32 %v1227, %v1242
        %v1244 = vadd.f32 %v1243, 0.112945676
        %v1245 = vmul.f32 %v1227, %v1244
        %v1246 = vadd.f32 %v1245, 0.4994258
        %v1247 = vmul.f32 %v1227, %v1246
        %v1248 = vadd.f32 %v1247, 1.0
        %v1249 = vrcp.pop %v1248
        %v1250 = vmul.f32 %v1248, %v1249
        %v1251 = vsub.f32 1.0, %v1250
        %v1252 = vmul.f32 %v1249, %v1251
        %v1253 = vadd.f32 %v1249, %v1252
        %vm1254 = vweird.f32 %v1248
        %vm1255 = vweird.f32 %v1249
        %vm1256 = vmor %vm1254, %vm1255
        %v1257 = vsel %vm1256, %v1249, %v1253
        %v1258 = vand.u32 2147483647, %v1248
        %vm1259 = vcmp.eq.f32.partialorder %v1258, 8.507059e+37
        %v1260 = vand.u32 %v1248, 2147483648
        %v1261 = vor.u32 1.1754944e-38, %v1260
        %v1262 = vsel %vm1259, %v1261, %v1257
        %v1263 = vmul.f32 %v1238, %v1262
        %v1264 = vmin.f32 %v1263, 1.0
        %v1265 = vmax.f32 %v1264, -1.0
        %v1266 = vmul.f32 %v1094, %v1094
        %v1267 = vmin.f32 16.0, %v1266
        %v1268 = vmul.f32 %v1267, 2.1237322e-06
        %v1269 = vadd.f32 %v1268, 0.00028619796
        %v1270 = vmul.f32 %v1267, %v1269
        %v1271 = vadd.f32 %v1270, 0.0036580483
        %v1272 = vmul.f32 %v1267, %v1271
        %v1273 = vadd.f32 %v1272, 0.05243302
        %v1274 = vmul.f32 %v1267, %v1273
        %v1275 = vadd.f32 %v1274, 0.18741608
        %v1276 = vmul.f32 %v1267, %v1275
        %v1277 = vadd.f32 %v1276, 1.1283791
        %v1278 = vmul.f32 %v1094, %v1277
        %v1279 = vmul.f32 %v1267, 3.8918573e-05
        %v1280 = vadd.f32 %v1279, 0.001143296
        %v1281 = vmul.f32 %v1267, %v1280
        %v1282 = vadd.f32 %v1281, 0.014752088
        %v1283 = vmul.f32 %v1267, %v1282
        %v1284 = vadd.f32 %v1283, 0.112945676
        %v1285 = vmul.f32 %v1267, %v1284
        %v1286 = vadd.f32 %v1285, 0.4994258
        %v1287 = vmul.f32 %v1267, %v1286
        %v1288 = vadd.f32 %v1287, 1.0
        %v1289 = vrcp.pop %v1288
        %v1290 = vmul.f32 %v1288, %v1289
        %v1291 = vsub.f32 1.0, %v1290
        %v1292 = vmul.f32 %v1289, %v1291
        %v1293 = vadd.f32 %v1289, %v1292
        %vm1294 = vweird.f32 %v1288
        %vm1295 = vweird.f32 %v1289
        %vm1296 = vmor %vm1294, %vm1295
        %v1297 = vsel %vm1296, %v1289, %v1293
        %v1298 = vand.u32 2147483647, %v1288
        %vm1299 = vcmp.eq.f32.partialorder %v1298, 8.507059e+37
        %v1300 = vand.u32 %v1288, 2147483648
        %v1301 = vor.u32 1.1754944e-38, %v1300
        %v1302 = vsel %vm1299, %v1301, %v1297
        %v1303 = vmul.f32 %v1278, %v1302
        %v1304 = vmin.f32 %v1303, 1.0
        %v1305 = vmax.f32 %v1304, -1.0
        %v1306 = vmul.f32 %v1095, %v1095
        %v1307 = vmin.f32 16.0, %v1306
        %v1308 = vmul.f32 %v1307, 2.1237322e-06
        %v1309 = vadd.f32 %v1308, 0.00028619796
        %v1310 = vmul.f32 %v1307, %v1309
        %v1311 = vadd.f32 %v1310, 0.0036580483
        %v1312 = vmul.f32 %v1307, %v1311
        %v1313 = vadd.f32 %v1312, 0.05243302
        %v1314 = vmul.f32 %v1307, %v1313
        %v1315 = vadd.f32 %v1314, 0.18741608
        %v1316 = vmul.f32 %v1307, %v1315
        %v1317 = vadd.f32 %v1316, 1.1283791
        %v1318 = vmul.f32 %v1095, %v1317
        %v1319 = vmul.f32 %v1307, 3.8918573e-05
        %v1320 = vadd.f32 %v1319, 0.001143296
        %v1321 = vmul.f32 %v1307, %v1320
        %v1322 = vadd.f32 %v1321, 0.014752088
        %v1323 = vmul.f32 %v1307, %v1322
        %v1324 = vadd.f32 %v1323, 0.112945676
        %v1325 = vmul.f32 %v1307, %v1324
        %v1326 = vadd.f32 %v1325, 0.4994258
        %v1327 = vmul.f32 %v1307, %v1326
        %v1328 = vadd.f32 %v1327, 1.0
        %v1329 = vrcp.pop %v1328
        %v1330 = vmul.f32 %v1328, %v1329
        %v1331 = vsub.f32 1.0, %v1330
        %v1332 = vmul.f32 %v1329, %v1331
        %v1333 = vadd.f32 %v1329, %v1332
        %vm1334 = vweird.f32 %v1328
        %vm1335 = vweird.f32 %v1329
        %vm1336 = vmor %vm1334, %vm1335
        %v1337 = vsel %vm1336, %v1329, %v1333
        %v1338 = vand.u32 2147483647, %v1328
        %vm1339 = vcmp.eq.f32.partialorder %v1338, 8.507059e+37
        %v1340 = vand.u32 %v1328, 2147483648
        %v1341 = vor.u32 1.1754944e-38, %v1340
        %v1342 = vsel %vm1339, %v1341, %v1337
        %v1343 = vmul.f32 %v1318, %v1342
        %v1344 = vmin.f32 %v1343, 1.0
        %v1345 = vmax.f32 %v1344, -1.0
        %v1346 = vmul.f32 %v1096, %v1096
        %v1347 = vmin.f32 16.0, %v1346
        %v1348 = vmul.f32 %v1347, 2.1237322e-06
        %v1349 = vadd.f32 %v1348, 0.00028619796
        %v1350 = vmul.f32 %v1347, %v1349
        %v1351 = vadd.f32 %v1350, 0.0036580483
        %v1352 = vmul.f32 %v1347, %v1351
        %v1353 = vadd.f32 %v1352, 0.05243302
        %v1354 = vmul.f32 %v1347, %v1353
        %v1355 = vadd.f32 %v1354, 0.18741608
        %v1356 = vmul.f32 %v1347, %v1355
        %v1357 = vadd.f32 %v1356, 1.1283791
        %v1358 = vmul.f32 %v1096, %v1357
        %v1359 = vmul.f32 %v1347, 3.8918573e-05
        %v1360 = vadd.f32 %v1359, 0.001143296
        %v1361 = vmul.f32 %v1347, %v1360
        %v1362 = vadd.f32 %v1361, 0.014752088
        %v1363 = vmul.f32 %v1347, %v1362
        %v1364 = vadd.f32 %v1363, 0.112945676
        %v1365 = vmul.f32 %v1347, %v1364
        %v1366 = vadd.f32 %v1365, 0.4994258
        %v1367 = vmul.f32 %v1347, %v1366
        %v1368 = vadd.f32 %v1367, 1.0
        %v1369 = vrcp.pop %v1368
        %v1370 = vmul.f32 %v1368, %v1369
        %v1371 = vsub.f32 1.0, %v1370
        %v1372 = vmul.f32 %v1369, %v1371
        %v1373 = vadd.f32 %v1369, %v1372
        %vm1374 = vweird.f32 %v1368
        %vm1375 = vweird.f32 %v1369
        %vm1376 = vmor %vm1374, %vm1375
        %v1377 = vsel %vm1376, %v1369, %v1373
        %v1378 = vand.u32 2147483647, %v1368
        %vm1379 = vcmp.eq.f32.partialorder %v1378, 8.507059e+37
        %v1380 = vand.u32 %v1368, 2147483648
        %v1381 = vor.u32 1.1754944e-38, %v1380
        %v1382 = vsel %vm1379, %v1381, %v1377
        %v1383 = vmul.f32 %v1358, %v1382
        %v1384 = vmin.f32 %v1383, 1.0
        %v1385 = vmax.f32 %v1384, -1.0
        %v1386 = vmul.f32 %v1097, %v1097
        %v1387 = vmin.f32 16.0, %v1386
        %v1388 = vmul.f32 %v1387, 2.1237322e-06
        %v1389 = vadd.f32 %v1388, 0.00028619796
        %v1390 = vmul.f32 %v1387, %v1389
        %v1391 = vadd.f32 %v1390, 0.0036580483
        %v1392 = vmul.f32 %v1387, %v1391
        %v1393 = vadd.f32 %v1392, 0.05243302
        %v1394 = vmul.f32 %v1387, %v1393
        %v1395 = vadd.f32 %v1394, 0.18741608
        %v1396 = vmul.f32 %v1387, %v1395
        %v1397 = vadd.f32 %v1396, 1.1283791
        %v1398 = vmul.f32 %v1097, %v1397
        %v1399 = vmul.f32 %v1387, 3.8918573e-05
        %v1400 = vadd.f32 %v1399, 0.001143296
        %v1401 = vmul.f32 %v1387, %v1400
        %v1402 = vadd.f32 %v1401, 0.014752088
        %v1403 = vmul.f32 %v1387, %v1402
        %v1404 = vadd.f32 %v1403, 0.112945676
        %v1405 = vmul.f32 %v1387, %v1404
        %v1406 = vadd.f32 %v1405, 0.4994258
        %v1407 = vmul.f32 %v1387, %v1406
        %v1408 = vadd.f32 %v1407, 1.0
        %v1409 = vrcp.pop %v1408
        %v1410 = vmul.f32 %v1408, %v1409
        %v1411 = vsub.f32 1.0, %v1410
        %v1412 = vmul.f32 %v1409, %v1411
        %v1413 = vadd.f32 %v1409, %v1412
        %vm1414 = vweird.f32 %v1408
        %vm1415 = vweird.f32 %v1409
        %vm1416 = vmor %vm1414, %vm1415
        %v1417 = vsel %vm1416, %v1409, %v1413
        %v1418 = vand.u32 2147483647, %v1408
        %vm1419 = vcmp.eq.f32.partialorder %v1418, 8.507059e+37
        %v1420 = vand.u32 %v1408, 2147483648
        %v1421 = vor.u32 1.1754944e-38, %v1420
        %v1422 = vsel %vm1419, %v1421, %v1417
        %v1423 = vmul.f32 %v1398, %v1422
        %v1424 = vmin.f32 %v1423, 1.0
        %v1425 = vmax.f32 %v1424, -1.0
        %v1426 = vmul.f32 %v1098, %v1098
        %v1427 = vmin.f32 16.0, %v1426
        %v1428 = vmul.f32 %v1427, 2.1237322e-06
        %v1429 = vadd.f32 %v1428, 0.00028619796
        %v1430 = vmul.f32 %v1427, %v1429
        %v1431 = vadd.f32 %v1430, 0.0036580483
        %v1432 = vmul.f32 %v1427, %v1431
        %v1433 = vadd.f32 %v1432, 0.05243302
        %v1434 = vmul.f32 %v1427, %v1433
        %v1435 = vadd.f32 %v1434, 0.18741608
        %v1436 = vmul.f32 %v1427, %v1435
        %v1437 = vadd.f32 %v1436, 1.1283791
        %v1438 = vmul.f32 %v1098, %v1437
        %v1439 = vmul.f32 %v1427, 3.8918573e-05
        %v1440 = vadd.f32 %v1439, 0.001143296
        %v1441 = vmul.f32 %v1427, %v1440
        %v1442 = vadd.f32 %v1441, 0.014752088
        %v1443 = vmul.f32 %v1427, %v1442
        %v1444 = vadd.f32 %v1443, 0.112945676
        %v1445 = vmul.f32 %v1427, %v1444
        %v1446 = vadd.f32 %v1445, 0.4994258
        %v1447 = vmul.f32 %v1427, %v1446
        %v1448 = vadd.f32 %v1447, 1.0
        %v1449 = vrcp.pop %v1448
        %v1450 = vmul.f32 %v1448, %v1449
        %v1451 = vsub.f32 1.0, %v1450
        %v1452 = vmul.f32 %v1449, %v1451
        %v1453 = vadd.f32 %v1449, %v1452
        %vm1454 = vweird.f32 %v1448
        %vm1455 = vweird.f32 %v1449
        %vm1456 = vmor %vm1454, %vm1455
        %v1457 = vsel %vm1456, %v1449, %v1453
        %v1458 = vand.u32 2147483647, %v1448
        %vm1459 = vcmp.eq.f32.partialorder %v1458, 8.507059e+37
        %v1460 = vand.u32 %v1448, 2147483648
        %v1461 = vor.u32 1.1754944e-38, %v1460
        %v1462 = vsel %vm1459, %v1461, %v1457
        %v1463 = vmul.f32 %v1438, %v1462
        %v1464 = vmin.f32 %v1463, 1.0
        %v1465 = vmax.f32 %v1464, -1.0
        %v1466 = vmul.f32 %v1099, %v1099
        %v1467 = vmin.f32 16.0, %v1466
        %v1468 = vmul.f32 %v1467, 2.1237322e-06
        %v1469 = vadd.f32 %v1468, 0.00028619796
        %v1470 = vmul.f32 %v1467, %v1469
        %v1471 = vadd.f32 %v1470, 0.0036580483
        %v1472 = vmul.f32 %v1467, %v1471
        %v1473 = vadd.f32 %v1472, 0.05243302
        %v1474 = vmul.f32 %v1467, %v1473
        %v1475 = vadd.f32 %v1474, 0.18741608
        %v1476 = vmul.f32 %v1467, %v1475
        %v1477 = vadd.f32 %v1476, 1.1283791
        %v1478 = vmul.f32 %v1099, %v1477
        %v1479 = vmul.f32 %v1467, 3.8918573e-05
        %v1480 = vadd.f32 %v1479, 0.001143296
        %v1481 = vmul.f32 %v1467, %v1480
        %v1482 = vadd.f32 %v1481, 0.014752088
        %v1483 = vmul.f32 %v1467, %v1482
        %v1484 = vadd.f32 %v1483, 0.112945676
        %v1485 = vmul.f32 %v1467, %v1484
        %v1486 = vadd.f32 %v1485, 0.4994258
        %v1487 = vmul.f32 %v1467, %v1486
        %v1488 = vadd.f32 %v1487, 1.0
        %v1489 = vrcp.pop %v1488
        %v1490 = vmul.f32 %v1488, %v1489
        %v1491 = vsub.f32 1.0, %v1490
        %v1492 = vmul.f32 %v1489, %v1491
        %v1493 = vadd.f32 %v1489, %v1492
        %vm1494 = vweird.f32 %v1488
        %vm1495 = vweird.f32 %v1489
        %vm1496 = vmor %vm1494, %vm1495
        %v1497 = vsel %vm1496, %v1489, %v1493
        %v1498 = vand.u32 2147483647, %v1488
        %vm1499 = vcmp.eq.f32.partialorder %v1498, 8.507059e+37
        %v1500 = vand.u32 %v1488, 2147483648
        %v1501 = vor.u32 1.1754944e-38, %v1500
        %v1502 = vsel %vm1499, %v1501, %v1497
        %v1503 = vmul.f32 %v1478, %v1502
        %v1504 = vmin.f32 %v1503, 1.0
        %v1505 = vmax.f32 %v1504, -1.0
        %v1506 = vmul.f32 %v1100, %v1100
        %v1507 = vmin.f32 16.0, %v1506
        %v1508 = vmul.f32 %v1507, 2.1237322e-06
        %v1509 = vadd.f32 %v1508, 0.00028619796
        %v1510 = vmul.f32 %v1507, %v1509
        %v1511 = vadd.f32 %v1510, 0.0036580483
        %v1512 = vmul.f32 %v1507, %v1511
        %v1513 = vadd.f32 %v1512, 0.05243302
        %v1514 = vmul.f32 %v1507, %v1513
        %v1515 = vadd.f32 %v1514, 0.18741608
        %v1516 = vmul.f32 %v1507, %v1515
        %v1517 = vadd.f32 %v1516, 1.1283791
        %v1518 = vmul.f32 %v1100, %v1517
        %v1519 = vmul.f32 %v1507, 3.8918573e-05
        %v1520 = vadd.f32 %v1519, 0.001143296
        %v1521 = vmul.f32 %v1507, %v1520
        %v1522 = vadd.f32 %v1521, 0.014752088
        %v1523 = vmul.f32 %v1507, %v1522
        %v1524 = vadd.f32 %v1523, 0.112945676
        %v1525 = vmul.f32 %v1507, %v1524
        %v1526 = vadd.f32 %v1525, 0.4994258
        %v1527 = vmul.f32 %v1507, %v1526
        %v1528 = vadd.f32 %v1527, 1.0
        %v1529 = vrcp.pop %v1528
        %v1530 = vmul.f32 %v1528, %v1529
        %v1531 = vsub.f32 1.0, %v1530
        %v1532 = vmul.f32 %v1529, %v1531
        %v1533 = vadd.f32 %v1529, %v1532
        %vm1534 = vweird.f32 %v1528
        %vm1535 = vweird.f32 %v1529
        %vm1536 = vmor %vm1534, %vm1535
        %v1537 = vsel %vm1536, %v1529, %v1533
        %v1538 = vand.u32 2147483647, %v1528
        %vm1539 = vcmp.eq.f32.partialorder %v1538, 8.507059e+37
        %v1540 = vand.u32 %v1528, 2147483648
        %v1541 = vor.u32 1.1754944e-38, %v1540
        %v1542 = vsel %vm1539, %v1541, %v1537
        %v1543 = vmul.f32 %v1518, %v1542
        %v1544 = vmin.f32 %v1543, 1.0
        %v1545 = vmax.f32 %v1544, -1.0
        %v1546 = vmul.f32 %v1101, %v1101
        %v1547 = vmin.f32 16.0, %v1546
        %v1548 = vmul.f32 %v1547, 2.1237322e-06
        %v1549 = vadd.f32 %v1548, 0.00028619796
        %v1550 = vmul.f32 %v1547, %v1549
        %v1551 = vadd.f32 %v1550, 0.0036580483
        %v1552 = vmul.f32 %v1547, %v1551
        %v1553 = vadd.f32 %v1552, 0.05243302
        %v1554 = vmul.f32 %v1547, %v1553
        %v1555 = vadd.f32 %v1554, 0.18741608
        %v1556 = vmul.f32 %v1547, %v1555
        %v1557 = vadd.f32 %v1556, 1.1283791
        %v1558 = vmul.f32 %v1101, %v1557
        %v1559 = vmul.f32 %v1547, 3.8918573e-05
        %v1560 = vadd.f32 %v1559, 0.001143296
        %v1561 = vmul.f32 %v1547, %v1560
        %v1562 = vadd.f32 %v1561, 0.014752088
        %v1563 = vmul.f32 %v1547, %v1562
        %v1564 = vadd.f32 %v1563, 0.112945676
        %v1565 = vmul.f32 %v1547, %v1564
        %v1566 = vadd.f32 %v1565, 0.4994258
        %v1567 = vmul.f32 %v1547, %v1566
        %v1568 = vadd.f32 %v1567, 1.0
        %v1569 = vrcp.pop %v1568
        %v1570 = vmul.f32 %v1568, %v1569
        %v1571 = vsub.f32 1.0, %v1570
        %v1572 = vmul.f32 %v1569, %v1571
        %v1573 = vadd.f32 %v1569, %v1572
        %vm1574 = vweird.f32 %v1568
        %vm1575 = vweird.f32 %v1569
        %vm1576 = vmor %vm1574, %vm1575
        %v1577 = vsel %vm1576, %v1569, %v1573
        %v1578 = vand.u32 2147483647, %v1568
        %vm1579 = vcmp.eq.f32.partialorder %v1578, 8.507059e+37
        %v1580 = vand.u32 %v1568, 2147483648
        %v1581 = vor.u32 1.1754944e-38, %v1580
        %v1582 = vsel %vm1579, %v1581, %v1577
        %v1583 = vmul.f32 %v1558, %v1582
        %v1584 = vmin.f32 %v1583, 1.0
        %v1585 = vmax.f32 %v1584, -1.0
        %v1586 = vmul.f32 %v1102, %v1102
        %v1587 = vmin.f32 16.0, %v1586
        %v1588 = vmul.f32 %v1587, 2.1237322e-06
        %v1589 = vadd.f32 %v1588, 0.00028619796
        %v1590 = vmul.f32 %v1587, %v1589
        %v1591 = vadd.f32 %v1590, 0.0036580483
        %v1592 = vmul.f32 %v1587, %v1591
        %v1593 = vadd.f32 %v1592, 0.05243302
        %v1594 = vmul.f32 %v1587, %v1593
        %v1595 = vadd.f32 %v1594, 0.18741608
        %v1596 = vmul.f32 %v1587, %v1595
        %v1597 = vadd.f32 %v1596, 1.1283791
        %v1598 = vmul.f32 %v1102, %v1597
        %v1599 = vmul.f32 %v1587, 3.8918573e-05
        %v1600 = vadd.f32 %v1599, 0.001143296
        %v1601 = vmul.f32 %v1587, %v1600
        %v1602 = vadd.f32 %v1601, 0.014752088
        %v1603 = vmul.f32 %v1587, %v1602
        %v1604 = vadd.f32 %v1603, 0.112945676
        %v1605 = vmul.f32 %v1587, %v1604
        %v1606 = vadd.f32 %v1605, 0.4994258
        %v1607 = vmul.f32 %v1587, %v1606
        %v1608 = vadd.f32 %v1607, 1.0
        %v1609 = vrcp.pop %v1608
        %v1610 = vmul.f32 %v1608, %v1609
        %v1611 = vsub.f32 1.0, %v1610
        %v1612 = vmul.f32 %v1609, %v1611
        %v1613 = vadd.f32 %v1609, %v1612
        %vm1614 = vweird.f32 %v1608
        %vm1615 = vweird.f32 %v1609
        %vm1616 = vmor %vm1614, %vm1615
        %v1617 = vsel %vm1616, %v1609, %v1613
        %v1618 = vand.u32 2147483647, %v1608
        %vm1619 = vcmp.eq.f32.partialorder %v1618, 8.507059e+37
        %v1620 = vand.u32 %v1608, 2147483648
        %v1621 = vor.u32 1.1754944e-38, %v1620
        %v1622 = vsel %vm1619, %v1621, %v1617
        %v1623 = vmul.f32 %v1598, %v1622
        %v1624 = vmin.f32 %v1623, 1.0
        %v1625 = vmax.f32 %v1624, -1.0
        %v1626 = vmul.f32 %v1103, %v1103
        %v1627 = vmin.f32 16.0, %v1626
        %v1628 = vmul.f32 %v1627, 2.1237322e-06
        %v1629 = vadd.f32 %v1628, 0.00028619796
        %v1630 = vmul.f32 %v1627, %v1629
        %v1631 = vadd.f32 %v1630, 0.0036580483
        %v1632 = vmul.f32 %v1627, %v1631
        %v1633 = vadd.f32 %v1632, 0.05243302
        %v1634 = vmul.f32 %v1627, %v1633
        %v1635 = vadd.f32 %v1634, 0.18741608
        %v1636 = vmul.f32 %v1627, %v1635
        %v1637 = vadd.f32 %v1636, 1.1283791
        %v1638 = vmul.f32 %v1103, %v1637
        %v1639 = vmul.f32 %v1627, 3.8918573e-05
        %v1640 = vadd.f32 %v1639, 0.001143296
        %v1641 = vmul.f32 %v1627, %v1640
        %v1642 = vadd.f32 %v1641, 0.014752088
        %v1643 = vmul.f32 %v1627, %v1642
        %v1644 = vadd.f32 %v1643, 0.112945676
        %v1645 = vmul.f32 %v1627, %v1644
        %v1646 = vadd.f32 %v1645, 0.4994258
        %v1647 = vmul.f32 %v1627, %v1646
        %v1648 = vadd.f32 %v1647, 1.0
        %v1649 = vrcp.pop %v1648
        %v1650 = vmul.f32 %v1648, %v1649
        %v1651 = vsub.f32 1.0, %v1650
        %v1652 = vmul.f32 %v1649, %v1651
        %v1653 = vadd.f32 %v1649, %v1652
        %vm1654 = vweird.f32 %v1648
        %vm1655 = vweird.f32 %v1649
        %vm1656 = vmor %vm1654, %vm1655
        %v1657 = vsel %vm1656, %v1649, %v1653
        %v1658 = vand.u32 2147483647, %v1648
        %vm1659 = vcmp.eq.f32.partialorder %v1658, 8.507059e+37
        %v1660 = vand.u32 %v1648, 2147483648
        %v1661 = vor.u32 1.1754944e-38, %v1660
        %v1662 = vsel %vm1659, %v1661, %v1657
        %v1663 = vmul.f32 %v1638, %v1662
        %v1664 = vmin.f32 %v1663, 1.0
        %v1665 = vmax.f32 %v1664, -1.0
        %v1666 = vmul.f32 %v1104, %v1104
        %v1667 = vmin.f32 16.0, %v1666
        %v1668 = vmul.f32 %v1667, 2.1237322e-06
        %v1669 = vadd.f32 %v1668, 0.00028619796
        %v1670 = vmul.f32 %v1667, %v1669
        %v1671 = vadd.f32 %v1670, 0.0036580483
        %v1672 = vmul.f32 %v1667, %v1671
        %v1673 = vadd.f32 %v1672, 0.05243302
        %v1674 = vmul.f32 %v1667, %v1673
        %v1675 = vadd.f32 %v1674, 0.18741608
        %v1676 = vmul.f32 %v1667, %v1675
        %v1677 = vadd.f32 %v1676, 1.1283791
        %v1678 = vmul.f32 %v1104, %v1677
        %v1679 = vmul.f32 %v1667, 3.8918573e-05
        %v1680 = vadd.f32 %v1679, 0.001143296
        %v1681 = vmul.f32 %v1667, %v1680
        %v1682 = vadd.f32 %v1681, 0.014752088
        %v1683 = vmul.f32 %v1667, %v1682
        %v1684 = vadd.f32 %v1683, 0.112945676
        %v1685 = vmul.f32 %v1667, %v1684
        %v1686 = vadd.f32 %v1685, 0.4994258
        %v1687 = vmul.f32 %v1667, %v1686
        %v1688 = vadd.f32 %v1687, 1.0
        %v1689 = vrcp.pop %v1688
        %v1690 = vmul.f32 %v1688, %v1689
        %v1691 = vsub.f32 1.0, %v1690
        %v1692 = vmul.f32 %v1689, %v1691
        %v1693 = vadd.f32 %v1689, %v1692
        %vm1694 = vweird.f32 %v1688
        %vm1695 = vweird.f32 %v1689
        %vm1696 = vmor %vm1694, %vm1695
        %v1697 = vsel %vm1696, %v1689, %v1693
        %v1698 = vand.u32 2147483647, %v1688
        %vm1699 = vcmp.eq.f32.partialorder %v1698, 8.507059e+37
        %v1700 = vand.u32 %v1688, 2147483648
        %v1701 = vor.u32 1.1754944e-38, %v1700
        %v1702 = vsel %vm1699, %v1701, %v1697
        %v1703 = vmul.f32 %v1678, %v1702
        %v1704 = vmin.f32 %v1703, 1.0
        %v1705 = vmax.f32 %v1704, -1.0
        %v1706 = vmul.f32 %v1105, %v1105
        %v1707 = vmin.f32 16.0, %v1706
        %v1708 = vmul.f32 %v1707, 2.1237322e-06
        %v1709 = vadd.f32 %v1708, 0.00028619796
        %v1710 = vmul.f32 %v1707, %v1709
        %v1711 = vadd.f32 %v1710, 0.0036580483
        %v1712 = vmul.f32 %v1707, %v1711
        %v1713 = vadd.f32 %v1712, 0.05243302
        %v1714 = vmul.f32 %v1707, %v1713
        %v1715 = vadd.f32 %v1714, 0.18741608
        %v1716 = vmul.f32 %v1707, %v1715
        %v1717 = vadd.f32 %v1716, 1.1283791
        %v1718 = vmul.f32 %v1105, %v1717
        %v1719 = vmul.f32 %v1707, 3.8918573e-05
        %v1720 = vadd.f32 %v1719, 0.001143296
        %v1721 = vmul.f32 %v1707, %v1720
        %v1722 = vadd.f32 %v1721, 0.014752088
        %v1723 = vmul.f32 %v1707, %v1722
        %v1724 = vadd.f32 %v1723, 0.112945676
        %v1725 = vmul.f32 %v1707, %v1724
        %v1726 = vadd.f32 %v1725, 0.4994258
        %v1727 = vmul.f32 %v1707, %v1726
        %v1728 = vadd.f32 %v1727, 1.0
        %v1729 = vrcp.pop %v1728
        %v1730 = vmul.f32 %v1728, %v1729
        %v1731 = vsub.f32 1.0, %v1730
        %v1732 = vmul.f32 %v1729, %v1731
        %v1733 = vadd.f32 %v1729, %v1732
        %vm1734 = vweird.f32 %v1728
        %vm1735 = vweird.f32 %v1729
        %vm1736 = vmor %vm1734, %vm1735
        %v1737 = vsel %vm1736, %v1729, %v1733
        %v1738 = vand.u32 2147483647, %v1728
        %vm1739 = vcmp.eq.f32.partialorder %v1738, 8.507059e+37
        %v1740 = vand.u32 %v1728, 2147483648
        %v1741 = vor.u32 1.1754944e-38, %v1740
        %v1742 = vsel %vm1739, %v1741, %v1737
        %v1743 = vmul.f32 %v1718, %v1742
        %v1744 = vmin.f32 %v1743, 1.0
        %v1745 = vmax.f32 %v1744, -1.0
        %v1746 = vadd.f32 %v1145, 1.0
        %v1747 = vadd.f32 %v1185, 1.0
        %v1748 = vadd.f32 %v1225, 1.0
        %v1749 = vadd.f32 %v1265, 1.0
        %v1750 = vadd.f32 %v1305, 1.0
        %v1751 = vadd.f32 %v1345, 1.0
        %v1752 = vadd.f32 %v1385, 1.0
        %v1753 = vadd.f32 %v1425, 1.0
        %v1754 = vadd.f32 %v1465, 1.0
        %v1755 = vadd.f32 %v1505, 1.0
        %v1756 = vadd.f32 %v1545, 1.0
        %v1757 = vadd.f32 %v1585, 1.0
        %v1758 = vadd.f32 %v1625, 1.0
        %v1759 = vadd.f32 %v1665, 1.0
        %v1760 = vadd.f32 %v1705, 1.0
        %v1761 = vadd.f32 %v1745, 1.0
        %v1762 = vmul.f32 %v1074, %v1746
        %v1763 = vmul.f32 %v1075, %v1747
        %v1764 = vmul.f32 %v1076, %v1748
        %v1765 = vmul.f32 %v1077, %v1749
        %v1766 = vmul.f32 %v1078, %v1750
        %v1767 = vmul.f32 %v1079, %v1751
        %v1768 = vmul.f32 %v1080, %v1752
        %v1769 = vmul.f32 %v1081, %v1753
        %v1770 = vmul.f32 %v1082, %v1754
        %v1771 = vmul.f32 %v1083, %v1755
        %v1772 = vmul.f32 %v1084, %v1756
        %v1773 = vmul.f32 %v1085, %v1757
        %v1774 = vmul.f32 %v1086, %v1758
        %v1775 = vmul.f32 %v1087, %v1759
        %v1776 = vmul.f32 %v1088, %v1760
        %v1777 = vmul.f32 %v1089, %v1761
        %v1778 = vld [vmem:[%s5] sm:$0xff]
        %v1779 = vld [vmem:[%s5 + $0x8] sm:$0xff]
        %v1780 = vld [vmem:[%s5 + $0x10] sm:$0xff]
        %v1781 = vld [vmem:[%s5 + $0x18] sm:$0xff]
        %v1782 = vld [vmem:[%s5 + $0x20] sm:$0xff]
        %v1783 = vld [vmem:[%s5 + $0x28] sm:$0xff]
        %v1784 = vld [vmem:[%s5 + $0x30] sm:$0xff]
        %v1785 = vld [vmem:[%s5 + $0x38] sm:$0xff]
        %v1786 = vld [vmem:[%s6] sm:$0x1]
        %v1788 = vperm.slane %v1786, 0
        %v1791 = vsel %vm674, %v1762, 0
        %v1794 = vsel %vm674, %v1763, 0
        %v1797 = vsel %vm674, %v1764, 0
        %v1800 = vsel %vm674, %v1765, 0
        %v1803 = vsel %vm674, %v1766, 0
        %v1806 = vsel %vm674, %v1767, 0
        %v1809 = vsel %vm674, %v1768, 0
        %v1812 = vsel %vm674, %v1769, 0
        %v1815 = vsel %vm674, %v1770, 0
        %v1818 = vsel %vm674, %v1771, 0
        %v1821 = vsel %vm674, %v1772, 0
        %v1824 = vsel %vm674, %v1773, 0
        %v1827 = vsel %vm674, %v1774, 0
        %v1830 = vsel %vm674, %v1775, 0
        %v1833 = vsel %vm674, %v1776, 0
        %v1836 = vsel %vm674, %v1777, 0
        %1838 = vmatpush.msra.mxu0 0.0
        %1839 = vmatpush.msra.mxu0 0.0
        %1840 = vmatpush.msra.mxu0 0.0
        %1841 = vmatpush.msra.mxu0 0.0
        %1842 = vmatpush.msra.mxu0 0.0
        %1843 = vmatpush.msra.mxu0 0.0
        %1844 = vmatpush.msra.mxu0 0.0
        %1845 = vmatpush.msra.mxu0 0.0
        %1846 = vmatpush.msra.mxu0 %v1785
        %1847 = vmatpush.msra.mxu0 %v1784
        %1848 = vmatpush.msra.mxu0 %v1783
        %1849 = vmatpush.msra.mxu0 %v1782
        %1850 = vmatpush.msra.mxu0 %v1781
        %1851 = vmatpush.msra.mxu0 %v1780
        %1852 = vmatpush.msra.mxu0 %v1779
        %1853 = vmatpush.msra.mxu0 %v1778
        %1854 = vmatmul.f32.gmra.mxu0 %v1791
        %v1855 = vpop.f32.mrf.mxu0
        %v1856 = vadd.f32 %v1788, %v1855
        %1857 = vmatmul.f32.gmra.mxu0 %v1794
        %v1858 = vpop.f32.mrf.mxu0
        %v1859 = vadd.f32 %v1788, %v1858
        %1860 = vmatmul.f32.gmra.mxu0 %v1797
        %v1861 = vpop.f32.mrf.mxu0
        %v1862 = vadd.f32 %v1788, %v1861
        %1863 = vmatmul.f32.gmra.mxu0 %v1800
        %v1864 = vpop.f32.mrf.mxu0
        %v1865 = vadd.f32 %v1788, %v1864
        %1866 = vmatmul.f32.gmra.mxu0 %v1803
        %v1867 = vpop.f32.mrf.mxu0
        %v1868 = vadd.f32 %v1788, %v1867
        %1869 = vmatmul.f32.gmra.mxu0 %v1806
        %v1870 = vpop.f32.mrf.mxu0
        %v1871 = vadd.f32 %v1788, %v1870
        %1872 = vmatmul.f32.gmra.mxu0 %v1809
        %v1873 = vpop.f32.mrf.mxu0
        %v1874 = vadd.f32 %v1788, %v1873
        %1875 = vmatmul.f32.gmra.mxu0 %v1812
        %v1876 = vpop.f32.mrf.mxu0
        %v1877 = vadd.f32 %v1788, %v1876
        %1878 = vmatmul.f32.gmra.mxu0 %v1815
        %v1879 = vpop.f32.mrf.mxu0
        %v1880 = vadd.f32 %v1788, %v1879
        %1881 = vmatmul.f32.gmra.mxu0 %v1818
        %v1882 = vpop.f32.mrf.mxu0
        %v1883 = vadd.f32 %v1788, %v1882
        %1884 = vmatmul.f32.gmra.mxu0 %v1821
        %v1885 = vpop.f32.mrf.mxu0
        %v1886 = vadd.f32 %v1788, %v1885
        %1887 = vmatmul.f32.gmra.mxu0 %v1824
        %v1888 = vpop.f32.mrf.mxu0
        %v1889 = vadd.f32 %v1788, %v1888
        %1890 = vmatmul.f32.gmra.mxu0 %v1827
        %v1891 = vpop.f32.mrf.mxu0
        %v1892 = vadd.f32 %v1788, %v1891
        %1893 = vmatmul.f32.gmra.mxu0 %v1830
        %v1894 = vpop.f32.mrf.mxu0
        %v1895 = vadd.f32 %v1788, %v1894
        %1896 = vmatmul.f32.gmra.mxu0 %v1833
        %v1897 = vpop.f32.mrf.mxu0
        %v1898 = vadd.f32 %v1788, %v1897
        %1899 = vmatmul.f32.gmra.mxu0 %v1836
        %v1900 = vpop.f32.mrf.mxu0
        %v1901 = vadd.f32 %v1788, %v1900
        %1902 = vdwg.mxu0
        %1903 = vst [vmem:[%s272] sm:$0xff] %v1856
        %1904 = vst [vmem:[%s272 + $0x8] sm:$0xff] %v1859
        %1905 = vst [vmem:[%s272 + $0x10] sm:$0xff] %v1862
        %1906 = vst [vmem:[%s272 + $0x18] sm:$0xff] %v1865
        %1907 = vst [vmem:[%s272 + $0x20] sm:$0xff] %v1868
        %1908 = vst [vmem:[%s272 + $0x28] sm:$0xff] %v1871
        %1909 = vst [vmem:[%s272 + $0x30] sm:$0xff] %v1874
        %1910 = vst [vmem:[%s272 + $0x38] sm:$0xff] %v1877
        %1911 = vst [vmem:[%s272 + $0x40] sm:$0xff] %v1880
        %1912 = vst [vmem:[%s272 + $0x48] sm:$0xff] %v1883
        %1913 = vst [vmem:[%s272 + $0x50] sm:$0xff] %v1886
        %1914 = vst [vmem:[%s272 + $0x58] sm:$0xff] %v1889
        %1915 = vst [vmem:[%s272 + $0x60] sm:$0xff] %v1892
        %1916 = vst [vmem:[%s272 + $0x68] sm:$0xff] %v1895
        %1917 = vst [vmem:[%s272 + $0x70] sm:$0xff] %v1898
        %1918 = vst [vmem:[%s272 + $0x78] sm:$0xff] %v1901
        %s1919 = sand.u32 %s181, 1
        %s1920 = scalar_lea.sflag [#allocation3], %s1919
        %s1921 = sand.u32 %s181, 1
        %s1922 = smul.addr %s1921, 128
        %s1923 = scalar_lea.vmem [#allocation2], %s1922
        // Predicated region
        $region49: #{tpu_custom_call.1} parent=47 // pred_check
          %p1924 = pneg %p191
        $region50: #{tpu_custom_call.1} parent=47 // pred_check_branch
          %1926 = sbr.rel (%p1924) target = $region52
        $region51: #{tpu_custom_call.1} parent=47 // pred_region
          %s1927 = smul.u32 16, %s21
          %1929 = vsyncadd %s1920, 0
          %s1930 = smul.addr %s1927, 8
          %s1931 = scalar_lea.hbm %s7, %s1930
          %s1932 = sshll.u32 %s1923, 4
          %s1933 = int_to_ptr.vmem [resolvable:$true] %s1932
          %s1934 = sshll.u32 %s1931, 4
          %s1935 = int_to_ptr.hbm [resolvable:$true] %s1934
          %1940 = dma.vmem_to_hbm [thread:$0]  %s1933, 2048, %s1935, %s1920, 128, 128, 8
        $region52: #{tpu_custom_call.1} parent=47 // pred_fallthru
          _
      $region48: #{tpu_custom_call.1} parent=5 // pred_fallthru
        _
      %p1941 = scmp.le.s32.totalorder 2, %s16
      // Predicated region
      $region53: #{tpu_custom_call.1} parent=5 // pred_check
        %p1942 = pneg %p1941
      $region54: #{tpu_custom_call.1} parent=5 // pred_check_branch
        %1944 = sbr.rel (%p1942) target = $region56
      $region55: #{tpu_custom_call.1} parent=5 // pred_region
        %s1945 = ssub.s32 %s16, 2
        // Predicated region
        $region57: #{tpu_custom_call.1} parent=55 // pred_check
          %p1946 = pneg %p197
        $region58: #{tpu_custom_call.1} parent=55 // pred_check_branch
          %1948 = sbr.rel (%p1946) target = $region60
        $region59: #{tpu_custom_call.1} parent=55 // pred_region
          %s1949 = sand.u32 %s182, 1
          %s1950 = scalar_lea.sflag [#allocation3], %s1949
          %s1951 = sand.u32 %s182, 1
          %s1952 = smul.addr %s1951, 128
          %s1953 = scalar_lea.vmem [#allocation2], %s1952
          %1955 = dma.done %s1950, 2048
        $region60: #{tpu_custom_call.1} parent=55 // pred_fallthru
          _
      $region56: #{tpu_custom_call.1} parent=5 // pred_fallthru
        _
    $region6: #{tpu_custom_call.1} parent=1 // loop_footer
      %s20 = sadd.s32 1, %s16
    $region7: #{tpu_custom_call.1} parent=1 // loop_footer_branch
      %15 = sbr.rel target = $region3
    $region8: #{tpu_custom_call.1} parent=1 // loop_exit
      _
    %1956 = vsyncpa [#allocation3], 1
    %s1957 = scalar_lea.sflag [#allocation3], 1
    %1958 = vsyncpa %s1957, 1

</llo_original>
